<compile_context>
chip_gen: v7x
topology: tpu7x:2x2x1
jax: 0.10.0
libtpu: 0.0.40
codegen_flags: <defaults>
</compile_context>

<pallas_src>
import jax
import jax.numpy as jnp
from jax.experimental import pallas as pl
from jax.experimental.pallas import tpu as pltpu

_BN_EPS = 1e-5


# --------------------- banded / block-diagonal weights ---------------------
def _banded_time_weight(W1, b1, W2, b2, T):
    """Banded weight for a gated TimeBlock acting on lane-packed (t, c) rows.

    Input  column j = t*Cin  + c,  t in [0, T)
    Output columns  [ P | Q ]: P_{t,o} at t*Cout + o, Q offset by To*Cout.
    The zero-padded residual (x at tap k=0) is folded into the P block.
    """
    K, Cin, Cout = W1.shape
    To = T - K + 1
    assert Cin <= Cout, "TimeBlock residual needs in_channels <= out_channels"
    res = jnp.zeros((Cin, Cout), jnp.float32).at[:, :Cin].set(
        jnp.eye(Cin, dtype=jnp.float32))
    W1r = W1.astype(jnp.float32).at[0].add(res)          # residual folded, f32
    # sel[i, k, t] = 1 iff input time i == output time t + tap k
    sel = (jnp.arange(T)[:, None, None]
           == jnp.arange(To)[None, None, :] + jnp.arange(K)[None, :, None]
           ).astype(jnp.float32)                          # (T, K, To)
    Wp = jnp.einsum("ikt,kco->icto", sel, W1r).reshape(T * Cin, To * Cout)
    Wq = jnp.einsum("ikt,kco->icto", sel,
                    W2.astype(jnp.float32)).reshape(T * Cin, To * Cout)
    Wb = jnp.concatenate([Wp, Wq], axis=1).astype(jnp.bfloat16)
    bb = jnp.concatenate([jnp.tile(b1, To), jnp.tile(b2, To)]
                         ).reshape(1, 2 * To * Cout).astype(jnp.float32)
    return Wb, bb, To


def _blockdiag_spatial_weight(Ws, bs, To):
    """Per-tap block-diagonal weights for the node-axis conv on lane-packed
    (t, c) rows:  Wb[k, t*C + c, t*S + s] = Ws[k, c, s]."""
    Ks, C, S = Ws.shape
    eyeT = jnp.eye(To, dtype=jnp.float32)
    Wb = jnp.einsum("tu,kcs->ktcus", eyeT, Ws.astype(jnp.float32)
                    ).reshape(Ks, To * C, To * S).astype(jnp.bfloat16)
    bb = jnp.tile(bs, To).reshape(1, To * S).astype(jnp.float32)
    return Wb, bb


# ----------------------- fused ST-Conv kernel (per batch) -----------------------
def _make_fused_stconv_kernel(N, T, Cin, Cout, S, Kt, Ks):
    To1 = T - Kt + 1
    To2 = To1 - Kt + 1
    pad = (Ks - 1) // 2
    L1 = To1 * Cout
    Ls = To1 * S
    L2 = To2 * Cout

    def kernel(x_ref, wt1_ref, bt1_ref, ws_ref, bs_ref, wt2_ref, bt2_ref,
               t3_ref, stats_ref):
        x = x_ref[0].astype(jnp.bfloat16)                       # (N, T*Cin)

        # ---- TimeBlock 1: (x_p + x_res) * sigmoid(x_q); residual folded in W
        pq = jnp.dot(x, wt1_ref[...],
                     preferred_element_type=jnp.float32) + bt1_ref[...]
        gate = 0.5 * (jnp.tanh(0.5 * pq[:, L1:]) + 1.0)          # sigmoid (EUP)
        t0 = (pq[:, :L1] * gate).astype(jnp.bfloat16)            # (N, To1*Cout)

        # ---- spatial graph conv over the node axis ('same' zero pad) + ReLU
        acc = jnp.zeros((N, Ls), jnp.float32)
        for k in range(Ks):
            shift = k - pad                       # tap k reads node n + shift
            if shift < 0:
                xk = jnp.concatenate(
                    [jnp.zeros((-shift, L1), jnp.bfloat16),
                     t0[:N + shift, :]], axis=0)
            elif shift > 0:
                xk = jnp.concatenate(
                    [t0[shift:, :],
                     jnp.zeros((shift, L1), jnp.bfloat16)], axis=0)
            else:
                xk = t0
            acc = acc + jnp.dot(xk, ws_ref[k],
                                preferred_element_type=jnp.float32)
        t1 = jnp.maximum(acc + bs_ref[...], 0.0).astype(jnp.bfloat16)  # (N, To1*S)

        # ---- TimeBlock 2 (same structure)
        pq2 = jnp.dot(t1, wt2_ref[...],
                      preferred_element_type=jnp.float32) + bt2_ref[...]
        gate2 = 0.5 * (jnp.tanh(0.5 * pq2[:, L2:]) + 1.0)
        t3 = pq2[:, :L2] * gate2                                 # (N, To2*Cout) f32

        t3_ref[0] = t3.astype(t3_ref.dtype)                      # bf16 store
        # per-(batch, node) partial BatchNorm statistics over (time, channel)
        stats_ref[0] = jnp.concatenate(
            [jnp.sum(t3, axis=1, keepdims=True),
             jnp.sum(t3 * t3, axis=1, keepdims=True)], axis=1)   # (N, 2)

    return kernel


def _bn_apply_kernel(x_ref, sc_ref, sh_ref, o_ref):
    # x_ref: (1, N, L2) bf16;  sc/sh: (N, 1) f32;  o_ref: (1, N, L2) f32
    o_ref[0] = x_ref[0].astype(jnp.float32) * sc_ref[...] + sh_ref[...]


# ----------------------------- STConvBlock -----------------------------
def st_conv_block(X, params, eps=_BN_EPS):
    B, N, T, Cin = X.shape
    Kt, _, Cout = params["t1_w1"].shape
    Ks, _, S = params["sp_w"].shape
    assert Ks % 2 == 1 and N > (Ks - 1) // 2
    To1 = T - Kt + 1
    To2 = To1 - Kt + 1
    L0, L1, Ls, L2 = T * Cin, To1 * Cout, To1 * S, To2 * Cout

    Wt1, bt1, _ = _banded_time_weight(params["t1_w1"], params["t1_b1"],
                                      params["t1_w2"], params["t1_b2"], T)
    Wsb, bsb = _blockdiag_spatial_weight(params["sp_w"], params["sp_b"], To1)
    Wt2, bt2, _ = _banded_time_weight(params["t2_w1"], params["t2_b1"],
                                      params["t2_w2"], params["t2_b2"], To1)

    x2 = X.reshape(B, N, L0)          # free row-major merge of (T, Cin)

    kernel = _make_fused_stconv_kernel(N, T, Cin, Cout, S, Kt, Ks)
    t3, stats = pl.pallas_call(
        kernel,
        out_shape=(jax.ShapeDtypeStruct((B, N, L2), jnp.bfloat16),
                   jax.ShapeDtypeStruct((B, N, 2), jnp.float32)),
        grid_spec=pltpu.PrefetchScalarGridSpec(
            num_scalar_prefetch=0,
            grid=(B,),
            in_specs=[
                pl.BlockSpec((1, N, L0), lambda b: (b, 0, 0)),
                pl.BlockSpec((L0, 2 * L1), lambda b: (0, 0)),
                pl.BlockSpec((1, 2 * L1), lambda b: (0, 0)),
                pl.BlockSpec((Ks, L1, Ls), lambda b: (0, 0, 0)),
                pl.BlockSpec((1, Ls), lambda b: (0, 0)),
                pl.BlockSpec((Ls, 2 * L2), lambda b: (0, 0)),
                pl.BlockSpec((1, 2 * L2), lambda b: (0, 0)),
            ],
            out_specs=(
                pl.BlockSpec((1, N, L2), lambda b: (b, 0, 0)),
                pl.BlockSpec((1, N, 2), lambda b: (b, 0, 0)),
            ),
        ),
        compiler_params=pltpu.CompilerParams(
            dimension_semantics=("parallel",)),
    )(x2, Wt1, bt1, Wsb, bsb, Wt2, bt2)

    # ---- BatchNorm2d(num_nodes), training-mode batch statistics (biased var)
    # TODO(synk): running_mean / running_var buffer updates are not materialized
    # (they do not affect the forward output in training mode).
    tot = jnp.sum(stats, axis=0)                       # (N, 2) -- tiny XLA math
    cnt = jnp.float32(B * L2)
    mean = tot[:, 0] / cnt
    var = jnp.maximum(tot[:, 1] / cnt - mean * mean, 0.0)
    scale = params["bn_gamma"] * jax.lax.rsqrt(var + eps)
    shift = params["bn_beta"] - mean * scale

    out = pl.pallas_call(
        _bn_apply_kernel,
        out_shape=jax.ShapeDtypeStruct((B, N, L2), jnp.float32),
        grid_spec=pltpu.PrefetchScalarGridSpec(
            num_scalar_prefetch=0,
            grid=(B,),
            in_specs=[
                pl.BlockSpec((1, N, L2), lambda b: (b, 0, 0)),
                pl.BlockSpec((N, 1), lambda b: (0, 0)),
                pl.BlockSpec((N, 1), lambda b: (0, 0)),
            ],
            out_specs=pl.BlockSpec((1, N, L2), lambda b: (b, 0, 0)),
        ),
        compiler_params=pltpu.CompilerParams(
            dimension_semantics=("parallel",)),
    )(t3, scale.reshape(N, 1).astype(jnp.float32),
      shift.reshape(N, 1).astype(jnp.float32))
    return out.reshape(B, N, To2, Cout)


# ----------------------- pure-JAX reference (f32) -----------------------
def _reference_forward(X, params, eps=_BN_EPS):
    def time_block_ref(x, w1, b1, w2, b2):
        K, Cin, Cout = w1.shape
        To = x.shape[2] - K + 1
        p = sum(jnp.einsum("bntc,co->bnto", x[:, :, k:k + To, :], w1[k])
                for k in range(K)) + b1
        q = sum(jnp.einsum("bntc,co->bnto", x[:, :, k:k + To, :], w2[k])
                for k in range(K)) + b2
        res = jnp.pad(x[:, :, :To, :],
                      ((0, 0), (0, 0), (0, 0), (0, Cout - Cin)))
        return (p + res) * jax.nn.sigmoid(q)

    def spatial_ref(x, ws, bs):
        Ks = ws.shape[0]
        pad = (Ks - 1) // 2
        N = x.shape[1]
        xp = jnp.pad(x, ((0, 0), (pad, pad), (0, 0), (0, 0)))
        y = sum(jnp.einsum("bntc,cs->bnts", xp[:, k:k + N, :, :], ws[k])
                for k in range(Ks)) + bs
        return jax.nn.relu(y)

    t0 = time_block_ref(X, params["t1_w1"], params["t1_b1"],
                        params["t1_w2"], params["t1_b2"])
    t1 = spatial_ref(t0, params["sp_w"], params["sp_b"])
    t3 = time_block_ref(t1, params["t2_w1"], params["t2_b1"],
                        params["t2_w2"], params["t2_b2"])
    mean = jnp.mean(t3, axis=(0, 2, 3), keepdims=True)
    var = jnp.mean((t3 - mean) ** 2, axis=(0, 2, 3), keepdims=True)
    g = params["bn_gamma"].reshape(1, -1, 1, 1)
    b = params["bn_beta"].reshape(1, -1, 1, 1)
    return (t3 - mean) * jax.lax.rsqrt(var + eps) * g + b


if __name__ == "__main__":
    B, N, T = 2, 8, 12
    in_channels, spatial_channels, out_channels = 4, 16, 32
    Kt = 3   # temporal kernel size (TimeBlock default)
    Ks = 3   # graph-conv kernel size (must be odd)

    key = jax.random.PRNGKey(0)
    ks = jax.random.split(key, 11)

    def init(k, shape, fan_in):
        bound = 1.0 / (fan_in ** 0.5)
        return jax.random.uniform(k, shape, jnp.float32, -bound, bound)

    params = {
        # temporal1: Conv2d(in_channels, out_channels, (1, Kt)) x2
        "t1_w1": init(ks[0], (Kt, in_channels, out_channels), in_channels * Kt),
        "t1_b1": init(ks[1], (out_channels,), in_channels * Kt),
        "t1_w2": init(ks[2], (Kt, in_channels, out_channels), in_channels * Kt),
        "t1_b2": init(ks[3], (out_channels,), in_channels * Kt),
        # spatial_conv: Conv2d(out_channels, spatial_channels, (Ks, 1))
        "sp_w":  init(ks[4], (Ks, out_channels, spatial_channels), out_channels * Ks),
        "sp_b":  init(ks[5], (spatial_channels,), out_channels * Ks),
        # temporal2: Conv2d(spatial_channels, out_channels, (1, Kt)) x2
        "t2_w1": init(ks[6], (Kt, spatial_channels, out_channels), spatial_channels * Kt),
        "t2_b1": init(ks[7], (out_channels,), spatial_channels * Kt),
        "t2_w2": init(ks[8], (Kt, spatial_channels, out_channels), spatial_channels * Kt),
        "t2_b2": init(ks[9], (out_channels,), spatial_channels * Kt),
        # BatchNorm2d(num_nodes) default affine init
        "bn_gamma": jnp.ones((N,), jnp.float32),
        "bn_beta": jnp.zeros((N,), jnp.float32),
    }

    X = jax.random.normal(ks[10], (B, N, T, in_channels), jnp.float32)

    out = jax.jit(lambda x: st_conv_block(x, params))(X)
    jax.block_until_ready(out)
    assert out.shape == (B, N, T - 2 * (Kt - 1), out_channels), out.shape
    assert out.dtype == jnp.float32

    # Loose check vs an f32 reference (kernel uses bf16 matmuls / bf16 t3).
    ref = _reference_forward(X, params)
    num = jnp.sqrt(jnp.sum((out - ref) ** 2))
    den = jnp.sqrt(jnp.sum(ref ** 2))
    rel = float(num / den)
    assert rel < 0.1, f"relative error too large: {rel}"
    print("KERNEL_OK")
</pallas_src>

<mosaic_0001>
module attributes {stable_mosaic.version = 11 : i64} {
  func.func @kernel(%arg0: i32, %arg1: memref<1x8x48xf32, #tpu.memory_space<vmem>>, %arg2: memref<48x640xbf16, #tpu.memory_space<vmem>>, %arg3: memref<1x640xf32, #tpu.memory_space<vmem>>, %arg4: memref<3x320x160xbf16, #tpu.memory_space<vmem>>, %arg5: memref<1x160xf32, #tpu.memory_space<vmem>>, %arg6: memref<160x512xbf16, #tpu.memory_space<vmem>>, %arg7: memref<1x512xf32, #tpu.memory_space<vmem>>, %arg8: memref<1x8x256xbf16, #tpu.memory_space<vmem>>, %arg9: memref<1x8x2xf32, #tpu.memory_space<vmem>>) attributes {dimension_semantics = [#tpu.dimension_semantics<parallel>], iteration_bounds = array<i64: 2>, scalar_prefetch = 0 : i64, scratch_operands = 0 : i64, tpu.core_type = #tpu.core_type<tc>, window_params = [{transform_indices = @transform_0, window_bounds = array<i64: 1, 8, 48>}, {pipeline_mode = #tpu.pipeline_mode<synchronous>, transform_indices = @transform_1, window_bounds = array<i64: 48, 640>}, {pipeline_mode = #tpu.pipeline_mode<synchronous>, transform_indices = @transform_2, window_bounds = array<i64: 1, 640>}, {pipeline_mode = #tpu.pipeline_mode<synchronous>, transform_indices = @transform_3, window_bounds = array<i64: 3, 320, 160>}, {pipeline_mode = #tpu.pipeline_mode<synchronous>, transform_indices = @transform_4, window_bounds = array<i64: 1, 160>}, {pipeline_mode = #tpu.pipeline_mode<synchronous>, transform_indices = @transform_5, window_bounds = array<i64: 160, 512>}, {pipeline_mode = #tpu.pipeline_mode<synchronous>, transform_indices = @transform_6, window_bounds = array<i64: 1, 512>}, {transform_indices = @transform_7, window_bounds = array<i64: 1, 8, 256>}, {transform_indices = @transform_8, window_bounds = array<i64: 1, 8, 2>}]} {
    %c0 = arith.constant 0 : index
    %c0_0 = arith.constant 0 : index
    %c0_1 = arith.constant 0 : index
    %0 = vector.load %arg1[%c0, %c0_0, %c0_1] : memref<1x8x48xf32, #tpu.memory_space<vmem>>, vector<1x8x48xf32>
    %1 = vector.shape_cast %0 : vector<1x8x48xf32> to vector<8x48xf32>
    %2 = arith.truncf %1 : vector<8x48xf32> to vector<8x48xbf16>
    %c0_2 = arith.constant 0 : index
    %c0_3 = arith.constant 0 : index
    %3 = vector.load %arg2[%c0_2, %c0_3] : memref<48x640xbf16, #tpu.memory_space<vmem>>, vector<48x640xbf16>
    %cst = arith.constant dense<0.000000e+00> : vector<8x640xf32>
    %4 = tpu.matmul %2, %3, %cst {dimension_numbers = #tpu.dot_dimension_numbers<[1], [0], [0], [1], [0, 0, 1, 1], [], []>} : vector<8x48xbf16>, vector<48x640xbf16>, vector<8x640xf32> -> vector<8x640xf32>
    %c0_4 = arith.constant 0 : index
    %c0_5 = arith.constant 0 : index
    %5 = vector.load %arg3[%c0_4, %c0_5] : memref<1x640xf32, #tpu.memory_space<vmem>>, vector<1x640xf32>
    %6 = vector.broadcast %5 : vector<1x640xf32> to vector<8x640xf32>
    %7 = arith.addf %4, %6 : vector<8x640xf32>
    %8 = vector.extract_strided_slice %7 {offsets = [0, 320], sizes = [8, 320], strides = [1, 1]} : vector<8x640xf32> to vector<8x320xf32>
    %cst_6 = arith.constant 5.000000e-01 : f32
    %9 = vector.broadcast %cst_6 : f32 to vector<8x320xf32>
    %10 = arith.mulf %9, %8 : vector<8x320xf32>
    %11 = math.tanh %10 : vector<8x320xf32>
    %cst_7 = arith.constant 1.000000e+00 : f32
    %12 = vector.broadcast %cst_7 : f32 to vector<8x320xf32>
    %13 = arith.addf %11, %12 : vector<8x320xf32>
    %cst_8 = arith.constant 5.000000e-01 : f32
    %14 = vector.broadcast %cst_8 : f32 to vector<8x320xf32>
    %15 = arith.mulf %14, %13 : vector<8x320xf32>
    %16 = vector.extract_strided_slice %7 {offsets = [0, 0], sizes = [8, 320], strides = [1, 1]} : vector<8x640xf32> to vector<8x320xf32>
    %17 = arith.mulf %16, %15 : vector<8x320xf32>
    %18 = arith.truncf %17 : vector<8x320xf32> to vector<8x320xbf16>
    %cst_9 = arith.constant 0.000000e+00 : f32
    %19 = vector.broadcast %cst_9 : f32 to vector<8x160xf32>
    %cst_10 = arith.constant 0.000000e+00 : bf16
    %20 = vector.broadcast %cst_10 : bf16 to vector<1x320xbf16>
    %21 = vector.extract_strided_slice %18 {offsets = [0, 0], sizes = [7, 320], strides = [1, 1]} : vector<8x320xbf16> to vector<7x320xbf16>
    %22 = tpu.concatenate %20, %21 in 0 : vector<1x320xbf16>, vector<7x320xbf16> -> vector<8x320xbf16>
    %c0_11 = arith.constant 0 : index
    %c0_12 = arith.constant 0 : index
    %c0_13 = arith.constant 0 : index
    %23 = vector.load %arg4[%c0_11, %c0_12, %c0_13] : memref<3x320x160xbf16, #tpu.memory_space<vmem>>, vector<1x320x160xbf16>
    %24 = vector.shape_cast %23 : vector<1x320x160xbf16> to vector<320x160xbf16>
    %cst_14 = arith.constant dense<0.000000e+00> : vector<8x160xf32>
    %25 = tpu.matmul %22, %24, %cst_14 {dimension_numbers = #tpu.dot_dimension_numbers<[1], [0], [0], [1], [0, 0, 1, 1], [], []>} : vector<8x320xbf16>, vector<320x160xbf16>, vector<8x160xf32> -> vector<8x160xf32>
    %26 = arith.addf %19, %25 : vector<8x160xf32>
    %c1 = arith.constant 1 : index
    %c0_15 = arith.constant 0 : index
    %c0_16 = arith.constant 0 : index
    %27 = vector.load %arg4[%c1, %c0_15, %c0_16] : memref<3x320x160xbf16, #tpu.memory_space<vmem>>, vector<1x320x160xbf16>
    %28 = vector.shape_cast %27 : vector<1x320x160xbf16> to vector<320x160xbf16>
    %cst_17 = arith.constant dense<0.000000e+00> : vector<8x160xf32>
    %29 = tpu.matmul %18, %28, %cst_17 {dimension_numbers = #tpu.dot_dimension_numbers<[1], [0], [0], [1], [0, 0, 1, 1], [], []>} : vector<8x320xbf16>, vector<320x160xbf16>, vector<8x160xf32> -> vector<8x160xf32>
    %30 = arith.addf %26, %29 : vector<8x160xf32>
    %31 = vector.extract_strided_slice %18 {offsets = [1, 0], sizes = [7, 320], strides = [1, 1]} : vector<8x320xbf16> to vector<7x320xbf16>
    %cst_18 = arith.constant 0.000000e+00 : bf16
    %32 = vector.broadcast %cst_18 : bf16 to vector<1x320xbf16>
    %33 = tpu.concatenate %31, %32 in 0 : vector<7x320xbf16>, vector<1x320xbf16> -> vector<8x320xbf16>
    %c2 = arith.constant 2 : index
    %c0_19 = arith.constant 0 : index
    %c0_20 = arith.constant 0 : index
    %34 = vector.load %arg4[%c2, %c0_19, %c0_20] : memref<3x320x160xbf16, #tpu.memory_space<vmem>>, vector<1x320x160xbf16>
    %35 = vector.shape_cast %34 : vector<1x320x160xbf16> to vector<320x160xbf16>
    %cst_21 = arith.constant dense<0.000000e+00> : vector<8x160xf32>
    %36 = tpu.matmul %33, %35, %cst_21 {dimension_numbers = #tpu.dot_dimension_numbers<[1], [0], [0], [1], [0, 0, 1, 1], [], []>} : vector<8x320xbf16>, vector<320x160xbf16>, vector<8x160xf32> -> vector<8x160xf32>
    %37 = arith.addf %30, %36 : vector<8x160xf32>
    %c0_22 = arith.constant 0 : index
    %c0_23 = arith.constant 0 : index
    %38 = vector.load %arg5[%c0_22, %c0_23] : memref<1x160xf32, #tpu.memory_space<vmem>>, vector<1x160xf32>
    %39 = vector.broadcast %38 : vector<1x160xf32> to vector<8x160xf32>
    %40 = arith.addf %37, %39 : vector<8x160xf32>
    %cst_24 = arith.constant 0.000000e+00 : f32
    %41 = vector.broadcast %cst_24 : f32 to vector<8x160xf32>
    %42 = arith.maximumf %40, %41 : vector<8x160xf32>
    %43 = arith.truncf %42 : vector<8x160xf32> to vector<8x160xbf16>
    %c0_25 = arith.constant 0 : index
    %c0_26 = arith.constant 0 : index
    %44 = vector.load %arg6[%c0_25, %c0_26] : memref<160x512xbf16, #tpu.memory_space<vmem>>, vector<160x512xbf16>
    %cst_27 = arith.constant dense<0.000000e+00> : vector<8x512xf32>
    %45 = tpu.matmul %43, %44, %cst_27 {dimension_numbers = #tpu.dot_dimension_numbers<[1], [0], [0], [1], [0, 0, 1, 1], [], []>} : vector<8x160xbf16>, vector<160x512xbf16>, vector<8x512xf32> -> vector<8x512xf32>
    %c0_28 = arith.constant 0 : index
    %c0_29 = arith.constant 0 : index
    %46 = vector.load %arg7[%c0_28, %c0_29] : memref<1x512xf32, #tpu.memory_space<vmem>>, vector<1x512xf32>
    %47 = vector.broadcast %46 : vector<1x512xf32> to vector<8x512xf32>
    %48 = arith.addf %45, %47 : vector<8x512xf32>
    %49 = vector.extract_strided_slice %48 {offsets = [0, 256], sizes = [8, 256], strides = [1, 1]} : vector<8x512xf32> to vector<8x256xf32>
    %cst_30 = arith.constant 5.000000e-01 : f32
    %50 = vector.broadcast %cst_30 : f32 to vector<8x256xf32>
    %51 = arith.mulf %50, %49 : vector<8x256xf32>
    %52 = math.tanh %51 : vector<8x256xf32>
    %cst_31 = arith.constant 1.000000e+00 : f32
    %53 = vector.broadcast %cst_31 : f32 to vector<8x256xf32>
    %54 = arith.addf %52, %53 : vector<8x256xf32>
    %cst_32 = arith.constant 5.000000e-01 : f32
    %55 = vector.broadcast %cst_32 : f32 to vector<8x256xf32>
    %56 = arith.mulf %55, %54 : vector<8x256xf32>
    %57 = vector.extract_strided_slice %48 {offsets = [0, 0], sizes = [8, 256], strides = [1, 1]} : vector<8x512xf32> to vector<8x256xf32>
    %58 = arith.mulf %57, %56 : vector<8x256xf32>
    %59 = arith.truncf %58 : vector<8x256xf32> to vector<8x256xbf16>
    %c0_33 = arith.constant 0 : index
    %c0_34 = arith.constant 0 : index
    %c0_35 = arith.constant 0 : index
    %60 = vector.load %arg8[%c0_33, %c0_34, %c0_35] : memref<1x8x256xbf16, #tpu.memory_space<vmem>>, vector<1x8x256xbf16>
    %61 = vector.shape_cast %60 : vector<1x8x256xbf16> to vector<8x256xbf16>
    %62 = vector.shape_cast %59 : vector<8x256xbf16> to vector<1x8x256xbf16>
    tpu.vector_store %arg8[%c0_33, %c0_34, %c0_35], %62 {strides = array<i32>} : memref<1x8x256xbf16, #tpu.memory_space<vmem>>, vector<1x8x256xbf16>,
    %cst_36 = arith.constant dense<0.000000e+00> : vector<8xf32>
    %63 = vector.multi_reduction <add>, %58, %cst_36 [1] : vector<8x256xf32> to vector<8xf32>
    %64 = vector.shape_cast %63 : vector<8xf32> to vector<8x1xf32>
    %65 = arith.mulf %58, %58 : vector<8x256xf32>
    %cst_37 = arith.constant dense<0.000000e+00> : vector<8xf32>
    %66 = vector.multi_reduction <add>, %65, %cst_37 [1] : vector<8x256xf32> to vector<8xf32>
    %67 = vector.shape_cast %66 : vector<8xf32> to vector<8x1xf32>
    %68 = tpu.concatenate %64, %67 in 1 : vector<8x1xf32>, vector<8x1xf32> -> vector<8x2xf32>
    %c0_38 = arith.constant 0 : index
    %c0_39 = arith.constant 0 : index
    %c0_40 = arith.constant 0 : index
    %69 = vector.load %arg9[%c0_38, %c0_39, %c0_40] : memref<1x8x2xf32, #tpu.memory_space<vmem>>, vector<1x8x2xf32>
    %70 = vector.shape_cast %69 : vector<1x8x2xf32> to vector<8x2xf32>
    %71 = vector.shape_cast %68 : vector<8x2xf32> to vector<1x8x2xf32>
    tpu.vector_store %arg9[%c0_38, %c0_39, %c0_40], %71 {strides = array<i32>} : memref<1x8x2xf32, #tpu.memory_space<vmem>>, vector<1x8x2xf32>,
    return
  }
  func.func @transform_0(%arg0: i32) -> (i32, i32, i32) {
    %c0_i32 = arith.constant 0 : i32
    %c0_i32_0 = arith.constant 0 : i32
    %c0_i32_1 = arith.constant 0 : i32
    return %arg0, %c0_i32, %c0_i32_0 : i32, i32, i32
  }
  func.func @transform_1(%arg0: i32) -> (i32, i32) {
    %c0_i32 = arith.constant 0 : i32
    %c0_i32_0 = arith.constant 0 : i32
    %c0_i32_1 = arith.constant 0 : i32
    return %c0_i32, %c0_i32_0 : i32, i32
  }
  func.func @transform_2(%arg0: i32) -> (i32, i32) {
    %c0_i32 = arith.constant 0 : i32
    %c0_i32_0 = arith.constant 0 : i32
    %c0_i32_1 = arith.constant 0 : i32
    return %c0_i32, %c0_i32_0 : i32, i32
  }
  func.func @transform_3(%arg0: i32) -> (i32, i32, i32) {
    %c0_i32 = arith.constant 0 : i32
    %c0_i32_0 = arith.constant 0 : i32
    %c0_i32_1 = arith.constant 0 : i32
    %c0_i32_2 = arith.constant 0 : i32
    return %c0_i32, %c0_i32_0, %c0_i32_1 : i32, i32, i32
  }
  func.func @transform_4(%arg0: i32) -> (i32, i32) {
    %c0_i32 = arith.constant 0 : i32
    %c0_i32_0 = arith.constant 0 : i32
    %c0_i32_1 = arith.constant 0 : i32
    return %c0_i32, %c0_i32_0 : i32, i32
  }
  func.func @transform_5(%arg0: i32) -> (i32, i32) {
    %c0_i32 = arith.constant 0 : i32
    %c0_i32_0 = arith.constant 0 : i32
    %c0_i32_1 = arith.constant 0 : i32
    return %c0_i32, %c0_i32_0 : i32, i32
  }
  func.func @transform_6(%arg0: i32) -> (i32, i32) {
    %c0_i32 = arith.constant 0 : i32
    %c0_i32_0 = arith.constant 0 : i32
    %c0_i32_1 = arith.constant 0 : i32
    return %c0_i32, %c0_i32_0 : i32, i32
  }
  func.func @transform_7(%arg0: i32) -> (i32, i32, i32) {
    %c0_i32 = arith.constant 0 : i32
    %c0_i32_0 = arith.constant 0 : i32
    %c0_i32_1 = arith.constant 0 : i32
    return %arg0, %c0_i32, %c0_i32_0 : i32, i32, i32
  }
  func.func @transform_8(%arg0: i32) -> (i32, i32, i32) {
    %c0_i32 = arith.constant 0 : i32
    %c0_i32_0 = arith.constant 0 : i32
    %c0_i32_1 = arith.constant 0 : i32
    return %arg0, %c0_i32, %c0_i32_0 : i32, i32, i32
  }
}

module attributes {stable_mosaic.version = 11 : i64} {
  func.func @_bn_apply_kernel(%arg0: i32, %arg1: memref<1x8x256xbf16, #tpu.memory_space<vmem>>, %arg2: memref<8x1xf32, #tpu.memory_space<vmem>>, %arg3: memref<8x1xf32, #tpu.memory_space<vmem>>, %arg4: memref<1x8x256xf32, #tpu.memory_space<vmem>>) attributes {dimension_semantics = [#tpu.dimension_semantics<parallel>], iteration_bounds = array<i64: 2>, scalar_prefetch = 0 : i64, scratch_operands = 0 : i64, tpu.core_type = #tpu.core_type<tc>, window_params = [{transform_indices = @transform_0, window_bounds = array<i64: 1, 8, 256>}, {pipeline_mode = #tpu.pipeline_mode<synchronous>, transform_indices = @transform_1, window_bounds = array<i64: 8, 1>}, {pipeline_mode = #tpu.pipeline_mode<synchronous>, transform_indices = @transform_2, window_bounds = array<i64: 8, 1>}, {transform_indices = @transform_3, window_bounds = array<i64: 1, 8, 256>}]} {
    %c0 = arith.constant 0 : index
    %c0_0 = arith.constant 0 : index
    %c0_1 = arith.constant 0 : index
    %0 = vector.load %arg1[%c0, %c0_0, %c0_1] : memref<1x8x256xbf16, #tpu.memory_space<vmem>>, vector<1x8x256xbf16>
    %1 = vector.shape_cast %0 : vector<1x8x256xbf16> to vector<8x256xbf16>
    %2 = arith.extf %1 : vector<8x256xbf16> to vector<8x256xf32>
    %c0_2 = arith.constant 0 : index
    %c0_3 = arith.constant 0 : index
    %3 = vector.load %arg2[%c0_2, %c0_3] : memref<8x1xf32, #tpu.memory_space<vmem>>, vector<8x1xf32>
    %4 = vector.broadcast %3 : vector<8x1xf32> to vector<8x256xf32>
    %5 = arith.mulf %2, %4 : vector<8x256xf32>
    %c0_4 = arith.constant 0 : index
    %c0_5 = arith.constant 0 : index
    %6 = vector.load %arg3[%c0_4, %c0_5] : memref<8x1xf32, #tpu.memory_space<vmem>>, vector<8x1xf32>
    %7 = vector.broadcast %6 : vector<8x1xf32> to vector<8x256xf32>
    %8 = arith.addf %5, %7 : vector<8x256xf32>
    %c0_6 = arith.constant 0 : index
    %c0_7 = arith.constant 0 : index
    %c0_8 = arith.constant 0 : index
    %9 = vector.load %arg4[%c0_6, %c0_7, %c0_8] : memref<1x8x256xf32, #tpu.memory_space<vmem>>, vector<1x8x256xf32>
    %10 = vector.shape_cast %9 : vector<1x8x256xf32> to vector<8x256xf32>
    %11 = vector.shape_cast %8 : vector<8x256xf32> to vector<1x8x256xf32>
    tpu.vector_store %arg4[%c0_6, %c0_7, %c0_8], %11 {strides = array<i32>} : memref<1x8x256xf32, #tpu.memory_space<vmem>>, vector<1x8x256xf32>,
    return
  }
  func.func @transform_0(%arg0: i32) -> (i32, i32, i32) {
    %c0_i32 = arith.constant 0 : i32
    %c0_i32_0 = arith.constant 0 : i32
    %c0_i32_1 = arith.constant 0 : i32
    return %arg0, %c0_i32, %c0_i32_0 : i32, i32, i32
  }
  func.func @transform_1(%arg0: i32) -> (i32, i32) {
    %c0_i32 = arith.constant 0 : i32
    %c0_i32_0 = arith.constant 0 : i32
    %c0_i32_1 = arith.constant 0 : i32
    return %c0_i32, %c0_i32_0 : i32, i32
  }
  func.func @transform_2(%arg0: i32) -> (i32, i32) {
    %c0_i32 = arith.constant 0 : i32
    %c0_i32_0 = arith.constant 0 : i32
    %c0_i32_1 = arith.constant 0 : i32
    return %c0_i32, %c0_i32_0 : i32, i32
  }
  func.func @transform_3(%arg0: i32) -> (i32, i32, i32) {
    %c0_i32 = arith.constant 0 : i32
    %c0_i32_0 = arith.constant 0 : i32
    %c0_i32_1 = arith.constant 0 : i32
    return %arg0, %c0_i32, %c0_i32_0 : i32, i32, i32
  }
}

</mosaic_0001>

<llo_original>
// kernel: tile.26
$region0: #{tile.26}
  #allocation2 [shape = 's32[1]{0}', space=sflag, size = 0x4, scoped, tag = 'scoped memory for tile.26']
  %s0 = inlined_call_operand.hbm [shape: f32[32], index: 0, kind: input, shape index: {}]
  %s1 = inlined_call_operand.vmem [shape: f32[10,32], index: 1, kind: output, shape index: {}]
  $region1: #{tile.26} parent=0
    #allocation0 [shape = 'u8[512]{0}', space=vmem, size = 0x400, scoped, tag = 'operand span for operand 0']
    #allocation1 [shape = 's32[1]{0}', space=sflag, size = 0x4, scoped, tag = 'scoped memory for tile.26']
    %2 = vsyncpa [#allocation1], 0
    // Predicated region
    $region2: #{tile.26} parent=1 // pred_check
      _
    $region3: #{tile.26} parent=1 // pred_check_branch
      %4 = sbr.rel (0) target = $region5
    $region4: #{tile.26} parent=1 // pred_region
      %s6 = ssub.s32 16, 16
      %7 = vsyncadd [#allocation1], %s6
      %s9 = sshll.u32 [#allocation0], 4
      %s10 = int_to_ptr.vmem [resolvable:$true] %s9
      %12 = dma.hbm_to_vmem [thread:$0]  %s0, 16, %s10, [#allocation1]
    $region5: #{tile.26} parent=1 // pred_fallthru
      _
    // Predicated region
    $region6: #{tile.26} parent=1 // pred_check
      _
    $region7: #{tile.26} parent=1 // pred_check_branch
      %14 = sbr.rel (0) target = $region9
    $region8: #{tile.26} parent=1 // pred_region
      %15 = dma.done [#allocation1], 16
    $region9: #{tile.26} parent=1 // pred_fallthru
      _
    %v16 = vld [vmem:[#allocation0] ss:$0 sm:$0xff]
    %17 = vst [vmem:[%s1] sm:$0xff] %v16
    %s18 = scalar_lea.vmem %s1, 8
    %19 = vst [vmem:[%s18] sm:$0xff] %v16
    %20 = vsyncpa [#allocation1], 1

// kernel: tile.27
$region0: #{tile.27}
  %s0 = inlined_call_operand.vmem [shape: f32[10,32], index: 0, kind: input, shape index: {}]
  %s1 = inlined_call_operand.vmem [shape: f32[320], index: 1, kind: output, shape index: {}]
  $region1: #{tile.27} parent=0
    #allocation0 [shape = 'u8[4096]{0}', space=vmem, size = 0x1000, scoped, tag = 'scoped mem for output reshape']
    %v2 = vld [vmem:[%s0] ss:$4 sm:$0x7]
    %vm3 = vcmask 261120
    %4 = vst.msk [vmem:[#allocation0] sm:$0x7] %vm3, %v2
    %s5 = scalar_lea.vmem %s0, 3
    %s6 = smov 3
    %v7 = vld [vmem:[%s5] ss:$4 sm:%s6]
    %8 = vrot.lane.b32.xlu0 %v7, 96
    %v9 = vpop.permute.xlu0 %8
    %vm10 = vcmask 1048320
    %11 = vst.msk [vmem:[#allocation0] sm:$0x3] %vm10, %v9
    %s12 = scalar_lea.vmem %s0, 2
    %s13 = smov 3
    %v14 = vld [vmem:[%s12] ss:$4 sm:%s13]
    %15 = vrot.lane.b32.xlu0 %v14, 64
    %v16 = vpop.permute.xlu0 %15
    %vm17 = vcmask 785920
    %18 = vst.msk [vmem:[#allocation0] sm:$0x3] %vm17, %v16
    %s19 = scalar_lea.vmem %s0, 1
    %v20 = vld [vmem:[%s19] ss:$4 sm:$0x7]
    %21 = vrot.lane.b32.xlu0 %v20, 32
    %v22 = vpop.permute.xlu0 %21
    %vm23 = vcmask 523520
    %24 = vst.msk [vmem:[#allocation0] sm:$0x7] %vm23, %v22
    %s26 = sshllo.u32 0, 4
    %v28 = vld [vmem:[#allocation0] sm:%s26]
    %s29 = sshllo.u32 0, 4
    %30 = vst [vmem:[%s1] sm:%s29] %v28

// kernel: tile.30
$region0: #{tile.30}
  #allocation0 [shape = 's32[1]{0}', space=sflag, size = 0x4, scoped, tag = 'scoped memory for tile.30']
  %s0 = inlined_call_operand.vmem [shape: f32[16], index: 0, kind: input, shape index: {}]
  %s1 = inlined_call_operand.vmem [shape: f32[10,16], index: 1, kind: output, shape index: {}]
  // Predicated region
  $region2: #{tile.30} parent=0 // pred_check
    _
  $region3: #{tile.30} parent=0 // pred_check_branch
    %3 = sbr.rel (0) target = $region5
  $region4: #{tile.30} parent=0 // pred_region
    _
  $region5: #{tile.30} parent=0 // pred_fallthru
    _
  %v4 = vld [vmem:[%s0] ss:$0 sm:$0xff]
  %5 = vst [vmem:[%s1] sm:$0xff] %v4
  %s6 = scalar_lea.vmem %s1, 8
  %7 = vst [vmem:[%s6] sm:$0xff] %v4

// kernel: tile.31
$region0: #{tile.31}
  %s0 = inlined_call_operand.vmem [shape: f32[10,16], index: 0, kind: input, shape index: {}]
  %s1 = inlined_call_operand.vmem [shape: f32[1,160], index: 1, kind: output, shape index: {}]
  $region1: #{tile.31} parent=0
    #allocation0 [shape = 'u8[8192]{0}', space=vmem, size = 0x2000, scoped, tag = 'scoped mem for output reshape']
    %s2 = smov 3
    %v3 = vld [vmem:[%s0] ss:$8 sm:%s2]
    %vm4 = vcmask 130048
    %5 = vst.msk [vmem:[#allocation0] ss:$8 sm:$0x3] %vm4, %v3
    %s6 = scalar_lea.vmem %s0, 7
    %v7 = vld [vmem:[%s6] sm:$0x1]
    %8 = vrot.lane.b32.xlu0 %v7, 112
    %v9 = vpop.permute.xlu0 %8
    %vm10 = vcmask 1048448
    %11 = vst.msk [vmem:[#allocation0] sm:$0x1] %vm10, %v9
    %s12 = scalar_lea.vmem %s0, 6
    %v13 = vld [vmem:[%s12] sm:$0x1]
    %14 = vrot.lane.b32.xlu0 %v13, 96
    %v15 = vpop.permute.xlu0 %14
    %vm16 = vcmask 917248
    %17 = vst.msk [vmem:[#allocation0] sm:$0x1] %vm16, %v15
    %s18 = scalar_lea.vmem %s0, 5
    %v19 = vld [vmem:[%s18] sm:$0x1]
    %20 = vrot.lane.b32.xlu0 %v19, 80
    %v21 = vpop.permute.xlu0 %20
    %vm22 = vcmask 786048
    %23 = vst.msk [vmem:[#allocation0] sm:$0x1] %vm22, %v21
    %s24 = scalar_lea.vmem %s0, 4
    %v25 = vld [vmem:[%s24] sm:$0x1]
    %26 = vrot.lane.b32.xlu0 %v25, 64
    %v27 = vpop.permute.xlu0 %26
    %vm28 = vcmask 654848
    %29 = vst.msk [vmem:[#allocation0] sm:$0x1] %vm28, %v27
    %s30 = scalar_lea.vmem %s0, 3
    %v31 = vld [vmem:[%s30] sm:$0x1]
    %32 = vrot.lane.b32.xlu0 %v31, 48
    %v33 = vpop.permute.xlu0 %32
    %vm34 = vcmask 523648
    %35 = vst.msk [vmem:[#allocation0] sm:$0x1] %vm34, %v33
    %s36 = scalar_lea.vmem %s0, 2
    %v37 = vld [vmem:[%s36] sm:$0x1]
    %38 = vrot.lane.b32.xlu0 %v37, 32
    %v39 = vpop.permute.xlu0 %38
    %vm40 = vcmask 392448
    %41 = vst.msk [vmem:[#allocation0] sm:$0x1] %vm40, %v39
    %s42 = scalar_lea.vmem %s0, 1
    %s43 = smov 3
    %v44 = vld [vmem:[%s42] ss:$8 sm:%s43]
    %45 = vrot.lane.b32.xlu0 %v44, 16
    %v46 = vpop.permute.xlu0 %45
    %vm47 = vcmask 261248
    %48 = vst.msk [vmem:[#allocation0] ss:$8 sm:$0x3] %vm47, %v46
    %s50 = sshllo.u32 0, 1
    %v52 = vld [vmem:[#allocation0] sm:%s50]
    %s53 = sshllo.u32 0, 1
    %54 = vst [vmem:[%s1] sm:%s53] %v52
    %s55 = scalar_lea.vmem [#allocation0], 8
    %v56 = vld [vmem:[%s55] sm:%s50]
    %s57 = sshllo.u32 0, 1
    %s58 = scalar_lea.vmem %s1, 1
    %59 = vst [vmem:[%s58] sm:%s57] %v56

// kernel: tile.38
$region0: #{tile.38}
  #allocation0 [shape = 's32[1]{0}', space=sflag, size = 0x4, scoped, tag = 'scoped memory for tile.38']
  %s0 = inlined_call_operand.vmem [shape: f32[32], index: 0, kind: input, shape index: {}]
  %s1 = inlined_call_operand.vmem [shape: f32[8,32], index: 1, kind: output, shape index: {}]
  // Predicated region
  $region2: #{tile.38} parent=0 // pred_check
    _
  $region3: #{tile.38} parent=0 // pred_check_branch
    %3 = sbr.rel (0) target = $region5
  $region4: #{tile.38} parent=0 // pred_region
    _
  $region5: #{tile.38} parent=0 // pred_fallthru
    _
  %v4 = vld [vmem:[%s0] ss:$0 sm:$0xff]
  %5 = vst [vmem:[%s1] sm:$0xff] %v4

// kernel: tile.39
$region0: #{tile.39}
  %s0 = inlined_call_operand.vmem [shape: f32[8,32], index: 0, kind: input, shape index: {}]
  %s1 = inlined_call_operand.vmem [shape: f32[256], index: 1, kind: output, shape index: {}]
  $region1: #{tile.39} parent=0
    #allocation0 [shape = 'u8[4096]{0}', space=vmem, size = 0x1000, scoped, tag = 'scoped mem for output reshape']
    %s2 = smov 3
    %v3 = vld [vmem:[%s0] ss:$4 sm:%s2]
    %vm4 = vcmask 261120
    %5 = vst.msk [vmem:[#allocation0] sm:$0x3] %vm4, %v3
    %s6 = scalar_lea.vmem %s0, 3
    %s7 = smov 3
    %v8 = vld [vmem:[%s6] ss:$4 sm:%s7]
    %9 = vrot.lane.b32.xlu0 %v8, 96
    %v10 = vpop.permute.xlu0 %9
    %vm11 = vcmask 1048320
    %12 = vst.msk [vmem:[#allocation0] sm:$0x3] %vm11, %v10
    %s13 = scalar_lea.vmem %s0, 2
    %s14 = smov 3
    %v15 = vld [vmem:[%s13] ss:$4 sm:%s14]
    %16 = vrot.lane.b32.xlu0 %v15, 64
    %v17 = vpop.permute.xlu0 %16
    %vm18 = vcmask 785920
    %19 = vst.msk [vmem:[#allocation0] sm:$0x3] %vm18, %v17
    %s20 = scalar_lea.vmem %s0, 1
    %s21 = smov 3
    %v22 = vld [vmem:[%s20] ss:$4 sm:%s21]
    %23 = vrot.lane.b32.xlu0 %v22, 32
    %v24 = vpop.permute.xlu0 %23
    %vm25 = vcmask 523520
    %26 = vst.msk [vmem:[#allocation0] sm:$0x3] %vm25, %v24
    %s28 = sshllo.u32 0, 2
    %v30 = vld [vmem:[#allocation0] sm:%s28]
    %s31 = sshllo.u32 0, 2
    %32 = vst [vmem:[%s1] sm:%s31] %v30

// kernel: _lambda_.3
$region0: #{_lambda_.3}
  #allocation0 [shape = 'u32[]', space=smem, size = 0x4, offset = 0x4, fixed_abs, tag = 'smem constant byte address 0x4 - core index']
  #allocation1 [shape = 'u32[144,128]{1,0:T(1,128)}', space=vmem, size = 0x12000, scoped, tag = 'internal scratch']
  %s0 = inlined_call_operand.vmem [shape: bf16[2,8,256], index: 0, kind: input, shape index: {}]
  %s1 = inlined_call_operand.vmem [shape: f32[8,1], index: 1, kind: input, shape index: {}]
  %s2 = inlined_call_operand.vmem [shape: f32[8,1], index: 2, kind: input, shape index: {}]
  %s3 = inlined_call_operand.vmem [shape: f32[2,8,256], index: 3, kind: output, shape index: {}]
  %s4 = sld [smem:[#allocation0]]
  $region45: #{_lambda_.3} parent=0
    _
  %s6 = ssub.s32 1, %s4
  %s7 = scalar_select 0, %s6, %s4
  loop: start=0, step=1, limit=4
  $region2: #{_lambda_.3} parent=0 // loop_pre_header
    _
  $region3: #{_lambda_.3} parent=0 // loop_header
    %s9 = sphi 0, %s13
    %p10 = scmp.ge.s32.totalorder %s9, 4
    %s19 = sphi 0, %s21
    %s22 = sphi 0, %s19
    %s23 = sphi 0, %s22
    %s39 = sphi 0, %s23
    %s43 = sphi 0, %s43
    %s45 = sphi 0, %s43
    %s46 = sphi 0, %s45
    %s60 = sphi 0, %s46
    %s64 = sphi 0, %s64
    %s66 = sphi 0, %s64
    %s67 = sphi 0, %s66
    %s81 = sphi 0, %s67
    %s87 = sphi 0, %s89
    %s90 = sphi 0, %s87
    %s91 = sphi 0, %s90
    %s107 = sphi 0, %s91
  $region4: #{_lambda_.3} parent=0 // loop_header_branch
    %12 = sbr.rel (%p10) target = $region8
  $region5: #{_lambda_.3} parent=0 // loop_body
    %s14 = ssub.s32 %s9, 1
    %s15 = ssub.s32 %s9, 2
    %s16 = sadd.s32 %s9, 1
    %s17 = ssub.s32 %s9, %s16
    %p18 = scmp.eq.s32.totalorder %s17, 0
    %s20 = sadd.s32 %s19, 1
    %s21 = scalar_select %p18, %s19, %s20
    %p24 = pneg %p18
    %p25 = scmp.eq.s32.totalorder %s9, 1
    %p26 = por %p24, %p25
    %p27 = scmp.ne.s32.totalorder %s19, %s22
    %p28 = scmp.eq.s32.totalorder %s9, 0
    %p29 = por %p27, %p28
    %p30 = scmp.ne.s32.totalorder %s19, %s22
    %p31 = scmp.eq.s32.totalorder %s14, 1
    %p32 = por %p30, %p31
    %p33 = scmp.ne.s32.totalorder %s22, %s23
    %p34 = scmp.eq.s32.totalorder %s14, 0
    %p35 = por %p33, %p34
    %p36 = scmp.ne.s32.totalorder %s22, %s23
    %p37 = scmp.eq.s32.totalorder %s15, 1
    %p38 = por %p36, %p37
    %p40 = scmp.ne.s32.totalorder %s23, %s39
    %p41 = scmp.eq.s32.totalorder %s15, 0
    %p42 = por %p40, %p41
    %s44 = sadd.s32 %s43, 1
    %p47 = scmp.eq.s32.totalorder %s9, 1
    %p48 = scmp.ne.s32.totalorder %s43, %s45
    %p49 = scmp.eq.s32.totalorder %s9, 0
    %p50 = por %p48, %p49
    %p51 = scmp.ne.s32.totalorder %s43, %s45
    %p52 = scmp.eq.s32.totalorder %s14, 1
    %p53 = por %p51, %p52
    %p54 = scmp.ne.s32.totalorder %s45, %s46
    %p55 = scmp.eq.s32.totalorder %s14, 0
    %p56 = por %p54, %p55
    %p57 = scmp.ne.s32.totalorder %s45, %s46
    %p58 = scmp.eq.s32.totalorder %s15, 1
    %p59 = por %p57, %p58
    %p61 = scmp.ne.s32.totalorder %s46, %s60
    %p62 = scmp.eq.s32.totalorder %s15, 0
    %p63 = por %p61, %p62
    %s65 = sadd.s32 %s64, 1
    %p68 = scmp.eq.s32.totalorder %s9, 1
    %p69 = scmp.ne.s32.totalorder %s64, %s66
    %p70 = scmp.eq.s32.totalorder %s9, 0
    %p71 = por %p69, %p70
    %p72 = scmp.ne.s32.totalorder %s64, %s66
    %p73 = scmp.eq.s32.totalorder %s14, 1
    %p74 = por %p72, %p73
    %p75 = scmp.ne.s32.totalorder %s66, %s67
    %p76 = scmp.eq.s32.totalorder %s14, 0
    %p77 = por %p75, %p76
    %p78 = scmp.ne.s32.totalorder %s66, %s67
    %p79 = scmp.eq.s32.totalorder %s15, 1
    %p80 = por %p78, %p79
    %p82 = scmp.ne.s32.totalorder %s67, %s81
    %p83 = scmp.eq.s32.totalorder %s15, 0
    %p84 = por %p82, %p83
    %s85 = ssub.s32 %s9, %s16
    %p86 = scmp.eq.s32.totalorder %s85, 0
    %s88 = sadd.s32 %s87, 1
    %s89 = scalar_select %p86, %s87, %s88
    %p92 = pneg %p86
    %p93 = scmp.eq.s32.totalorder %s9, 1
    %p94 = por %p92, %p93
    %p95 = scmp.ne.s32.totalorder %s87, %s90
    %p96 = scmp.eq.s32.totalorder %s9, 0
    %p97 = por %p95, %p96
    %p98 = scmp.ne.s32.totalorder %s87, %s90
    %p99 = scmp.eq.s32.totalorder %s14, 1
    %p100 = por %p98, %p99
    %p101 = scmp.ne.s32.totalorder %s90, %s91
    %p102 = scmp.eq.s32.totalorder %s14, 0
    %p103 = por %p101, %p102
    %p104 = scmp.ne.s32.totalorder %s90, %s91
    %p105 = scmp.eq.s32.totalorder %s15, 1
    %p106 = por %p104, %p105
    %p108 = scmp.ne.s32.totalorder %s91, %s107
    %p109 = scmp.eq.s32.totalorder %s15, 0
    %p110 = por %p108, %p109
    %p111 = scmp.le.s32.totalorder 1, %s9
    %p112 = scmp.lt.s32.totalorder %s9, 3
    %p113 = pnand %p111, %p112
    %p114 = pneg %p113
    // Predicated region
    $region9: #{_lambda_.3} parent=5 // pred_check
      _
    $region10: #{_lambda_.3} parent=5 // pred_check_branch
      %116 = sbr.rel (%p113) target = $region12
    $region11: #{_lambda_.3} parent=5 // pred_region
      %s117 = ssub.s32 %s9, 1
      // Predicated region
      $region13: #{_lambda_.3} parent=11 // pred_check
        %p118 = pneg %p56
      $region14: #{_lambda_.3} parent=11 // pred_check_branch
        %120 = sbr.rel (%p118) target = $region16
      $region15: #{_lambda_.3} parent=11 // pred_region
        _
      $region16: #{_lambda_.3} parent=11 // pred_fallthru
        _
      // Predicated region
      $region17: #{_lambda_.3} parent=11 // pred_check
        %p121 = pneg %p77
      $region18: #{_lambda_.3} parent=11 // pred_check_branch
        %123 = sbr.rel (%p121) target = $region20
      $region19: #{_lambda_.3} parent=11 // pred_region
        _
      $region20: #{_lambda_.3} parent=11 // pred_fallthru
        _
    $region12: #{_lambda_.3} parent=5 // pred_fallthru
      _
    %p124 = scmp.lt.s32.totalorder %s9, 2
    // Predicated region
    $region21: #{_lambda_.3} parent=5 // pred_check
      %p125 = pneg %p124
    $region22: #{_lambda_.3} parent=5 // pred_check_branch
      %127 = sbr.rel (%p125) target = $region24
    $region23: #{_lambda_.3} parent=5 // pred_region
      // Predicated region
      $region25: #{_lambda_.3} parent=23 // pred_check
        %p128 = pneg %p29
      $region26: #{_lambda_.3} parent=23 // pred_check_branch
        %130 = sbr.rel (%p128) target = $region28
      $region27: #{_lambda_.3} parent=23 // pred_region
        %p131 = scmp.lt.s32.totalorder %s9, 1
        %s132 = scalar_select %p131, %s9, 1
        %s133 = smul.addr %s132, 2
        %s134 = smul.addr %s133, 4
        %s135 = scalar_lea.vmem %s0, %s134
      $region28: #{_lambda_.3} parent=23 // pred_fallthru
        _
    $region24: #{_lambda_.3} parent=5 // pred_fallthru
      _
    %p136 = scmp.le.s32.totalorder 1, %s9
    %p137 = scmp.lt.s32.totalorder %s9, 3
    %p138 = pnand %p136, %p137
    %p139 = pneg %p138
    // Predicated region
    $region29: #{_lambda_.3} parent=5 // pred_check
      _
    $region30: #{_lambda_.3} parent=5 // pred_check_branch
      %141 = sbr.rel (%p138) target = $region32
    $region31: #{_lambda_.3} parent=5 // pred_region
      %s142 = ssub.s32 %s9, 1
      %p143 = scmp.lt.s32.totalorder %s14, 1
      %s144 = scalar_select %p143, %s14, 1
      %s145 = smul.addr %s144, 2
      %s146 = smul.addr %s145, 4
      %s147 = scalar_lea.vmem %s0, %s146
      %p148 = pneg %p35
      %p149 = pneg %p32
      %p150 = pneg %p56
      %p151 = pneg %p53
      %p152 = pneg %p77
      %p153 = pneg %p74
      %p154 = pneg %p103
      %p155 = pneg %p100
      %p156 = scmp.lt.s32.totalorder %s14, 1
      %s157 = scalar_select %p156, %s14, 1
      %s158 = smul.addr %s157, 2
      %s159 = smul.addr %s158, 8
      %s160 = scalar_lea.vmem %s3, %s159
      %p161 = scmp.lt.s32.totalorder %s14, 1
      %s162 = scalar_select %p161, %s14, 1
      %s163 = smul.addr %s162, 2
      %s164 = smul.addr %s163, 4
      %s165 = scalar_lea.vmem %s0, %s164
      %p166 = scmp.lt.s32.totalorder %s14, 1
      %s167 = scalar_select %p166, %s14, 1
      %s168 = smul.addr %s167, 2
      %s169 = smul.addr %s168, 8
      %s170 = scalar_lea.vmem %s3, %s169
      %v171 = vld [vmem:[%s165] sm:$0xff]
      %v172 = vunpack.c.l.bf16 %v171
      %v173 = vunpack.c.h.bf16 %v171
      %v174 = vld [vmem:[%s1] sm:$0xff]
      %176 = vset.pattern.permute.xlu0 0
      %177 = vperm.xlu0 %176, %v174
      %v178 = vpop.permute.xlu0 %177
      %v180 = vmul.f32 %v172, %v178
      %v181 = vmul.f32 %v173, %v178
      %v182 = vld [vmem:[%s2] sm:$0xff]
      %184 = vset.pattern.permute.xlu0 0
      %185 = vperm.xlu0 %184, %v182
      %v186 = vpop.permute.xlu0 %185
      %v188 = vadd.f32 %v180, %v186
      %v189 = vadd.f32 %v181, %v186
      %190 = vst [vmem:[%s170] sm:$0xff] %v188
      %191 = vst [vmem:[%s170 + $0x8] sm:$0xff] %v189
      %p192 = scmp.lt.s32.totalorder %s14, 1
      %s193 = scalar_select %p192, %s14, 1
      %s194 = smul.addr %s193, 2
      %s195 = smul.addr %s194, 8
      %s196 = scalar_lea.vmem %s3, %s195
      // Predicated region
      $region33: #{_lambda_.3} parent=31 // pred_check
        %p197 = pneg %p100
      $region34: #{_lambda_.3} parent=31 // pred_check_branch
        %199 = sbr.rel (%p197) target = $region36
      $region35: #{_lambda_.3} parent=31 // pred_region
        _
      $region36: #{_lambda_.3} parent=31 // pred_fallthru
        _
    $region32: #{_lambda_.3} parent=5 // pred_fallthru
      _
    %p200 = scmp.le.s32.totalorder 2, %s9
    // Predicated region
    $region37: #{_lambda_.3} parent=5 // pred_check
      %p201 = pneg %p200
    $region38: #{_lambda_.3} parent=5 // pred_check_branch
      %203 = sbr.rel (%p201) target = $region40
    $region39: #{_lambda_.3} parent=5 // pred_region
      %s204 = ssub.s32 %s9, 2
      // Predicated region
      $region41: #{_lambda_.3} parent=39 // pred_check
        %p205 = pneg %p106
      $region42: #{_lambda_.3} parent=39 // pred_check_branch
        %207 = sbr.rel (%p205) target = $region44
      $region43: #{_lambda_.3} parent=39 // pred_region
        %p208 = scmp.lt.s32.totalorder %s15, 1
        %s209 = scalar_select %p208, %s15, 1
        %s210 = smul.addr %s209, 2
        %s211 = smul.addr %s210, 8
        %s212 = scalar_lea.vmem %s3, %s211
      $region44: #{_lambda_.3} parent=39 // pred_fallthru
        _
    $region40: #{_lambda_.3} parent=5 // pred_fallthru
      _
  $region6: #{_lambda_.3} parent=0 // loop_footer
    %s13 = sadd.s32 1, %s9
  $region7: #{_lambda_.3} parent=0 // loop_footer_branch
    %8 = sbr.rel target = $region3
  $region8: #{_lambda_.3} parent=0 // loop_exit
    _

// kernel: _lambda_.2
$region0: #{_lambda_.2}
  #allocation0 [shape = 'u32[]', space=smem, size = 0x4, offset = 0x4, fixed_abs, tag = 'smem constant byte address 0x4 - core index']
  #allocation1 [shape = 'u32[144,128]{1,0:T(1,128)}', space=vmem, size = 0x12000, scoped, tag = 'internal scratch']
  %s0 = inlined_call_operand.vmem [shape: f32[2,8,48], index: 0, kind: input, shape index: {}]
  %s1 = inlined_call_operand.vmem [shape: bf16[48,640], index: 1, kind: input, shape index: {}]
  %s2 = inlined_call_operand.vmem [shape: f32[1,640], index: 2, kind: input, shape index: {}]
  %s3 = inlined_call_operand.vmem [shape: bf16[3,320,160], index: 3, kind: input, shape index: {}]
  %s4 = inlined_call_operand.vmem [shape: f32[1,160], index: 4, kind: input, shape index: {}]
  %s5 = inlined_call_operand.vmem [shape: bf16[160,512], index: 5, kind: input, shape index: {}]
  %s6 = inlined_call_operand.vmem [shape: f32[1,512], index: 6, kind: input, shape index: {}]
  %s7 = inlined_call_operand.vmem [shape: bf16[2,8,256], index: 7, kind: output, shape index: {0}]
  %s8 = inlined_call_operand.vmem [shape: f32[2,8,2], index: 8, kind: output, shape index: {1}]
  %9 = xla_tuple %s7, %s8
  %s10 = sld [smem:[#allocation0]]
  $region69: #{_lambda_.2} parent=0
    _
  %s12 = ssub.s32 1, %s10
  %s13 = scalar_select 0, %s12, %s10
  loop: start=0, step=1, limit=4
  $region2: #{_lambda_.2} parent=0 // loop_pre_header
    _
  $region3: #{_lambda_.2} parent=0 // loop_header
    %s15 = sphi 0, %s19
    %p16 = scmp.ge.s32.totalorder %s15, 4
    %s25 = sphi 0, %s27
    %s28 = sphi 0, %s25
    %s29 = sphi 0, %s28
    %s45 = sphi 0, %s29
    %s49 = sphi 0, %s49
    %s51 = sphi 0, %s49
    %s52 = sphi 0, %s51
    %s66 = sphi 0, %s52
    %s70 = sphi 0, %s70
    %s72 = sphi 0, %s70
    %s73 = sphi 0, %s72
    %s87 = sphi 0, %s73
    %s91 = sphi 0, %s91
    %s93 = sphi 0, %s91
    %s94 = sphi 0, %s93
    %s108 = sphi 0, %s94
    %s112 = sphi 0, %s112
    %s114 = sphi 0, %s112
    %s115 = sphi 0, %s114
    %s129 = sphi 0, %s115
    %s133 = sphi 0, %s133
    %s135 = sphi 0, %s133
    %s136 = sphi 0, %s135
    %s150 = sphi 0, %s136
    %s154 = sphi 0, %s154
    %s156 = sphi 0, %s154
    %s157 = sphi 0, %s156
    %s171 = sphi 0, %s157
    %s177 = sphi 0, %s179
    %s180 = sphi 0, %s177
    %s181 = sphi 0, %s180
    %s197 = sphi 0, %s181
    %s203 = sphi 0, %s205
    %s206 = sphi 0, %s203
    %s207 = sphi 0, %s206
    %s223 = sphi 0, %s207
  $region4: #{_lambda_.2} parent=0 // loop_header_branch
    %18 = sbr.rel (%p16) target = $region8
  $region5: #{_lambda_.2} parent=0 // loop_body
    %s20 = ssub.s32 %s15, 1
    %s21 = ssub.s32 %s15, 2
    %s22 = sadd.s32 %s15, 1
    %s23 = ssub.s32 %s15, %s22
    %p24 = scmp.eq.s32.totalorder %s23, 0
    %s26 = sadd.s32 %s25, 1
    %s27 = scalar_select %p24, %s25, %s26
    %p30 = pneg %p24
    %p31 = scmp.eq.s32.totalorder %s15, 1
    %p32 = por %p30, %p31
    %p33 = scmp.ne.s32.totalorder %s25, %s28
    %p34 = scmp.eq.s32.totalorder %s15, 0
    %p35 = por %p33, %p34
    %p36 = scmp.ne.s32.totalorder %s25, %s28
    %p37 = scmp.eq.s32.totalorder %s20, 1
    %p38 = por %p36, %p37
    %p39 = scmp.ne.s32.totalorder %s28, %s29
    %p40 = scmp.eq.s32.totalorder %s20, 0
    %p41 = por %p39, %p40
    %p42 = scmp.ne.s32.totalorder %s28, %s29
    %p43 = scmp.eq.s32.totalorder %s21, 1
    %p44 = por %p42, %p43
    %p46 = scmp.ne.s32.totalorder %s29, %s45
    %p47 = scmp.eq.s32.totalorder %s21, 0
    %p48 = por %p46, %p47
    %s50 = sadd.s32 %s49, 1
    %p53 = scmp.eq.s32.totalorder %s15, 1
    %p54 = scmp.ne.s32.totalorder %s49, %s51
    %p55 = scmp.eq.s32.totalorder %s15, 0
    %p56 = por %p54, %p55
    %p57 = scmp.ne.s32.totalorder %s49, %s51
    %p58 = scmp.eq.s32.totalorder %s20, 1
    %p59 = por %p57, %p58
    %p60 = scmp.ne.s32.totalorder %s51, %s52
    %p61 = scmp.eq.s32.totalorder %s20, 0
    %p62 = por %p60, %p61
    %p63 = scmp.ne.s32.totalorder %s51, %s52
    %p64 = scmp.eq.s32.totalorder %s21, 1
    %p65 = por %p63, %p64
    %p67 = scmp.ne.s32.totalorder %s52, %s66
    %p68 = scmp.eq.s32.totalorder %s21, 0
    %p69 = por %p67, %p68
    %s71 = sadd.s32 %s70, 1
    %p74 = scmp.eq.s32.totalorder %s15, 1
    %p75 = scmp.ne.s32.totalorder %s70, %s72
    %p76 = scmp.eq.s32.totalorder %s15, 0
    %p77 = por %p75, %p76
    %p78 = scmp.ne.s32.totalorder %s70, %s72
    %p79 = scmp.eq.s32.totalorder %s20, 1
    %p80 = por %p78, %p79
    %p81 = scmp.ne.s32.totalorder %s72, %s73
    %p82 = scmp.eq.s32.totalorder %s20, 0
    %p83 = por %p81, %p82
    %p84 = scmp.ne.s32.totalorder %s72, %s73
    %p85 = scmp.eq.s32.totalorder %s21, 1
    %p86 = por %p84, %p85
    %p88 = scmp.ne.s32.totalorder %s73, %s87
    %p89 = scmp.eq.s32.totalorder %s21, 0
    %p90 = por %p88, %p89
    %s92 = sadd.s32 %s91, 1
    %p95 = scmp.eq.s32.totalorder %s15, 1
    %p96 = scmp.ne.s32.totalorder %s91, %s93
    %p97 = scmp.eq.s32.totalorder %s15, 0
    %p98 = por %p96, %p97
    %p99 = scmp.ne.s32.totalorder %s91, %s93
    %p100 = scmp.eq.s32.totalorder %s20, 1
    %p101 = por %p99, %p100
    %p102 = scmp.ne.s32.totalorder %s93, %s94
    %p103 = scmp.eq.s32.totalorder %s20, 0
    %p104 = por %p102, %p103
    %p105 = scmp.ne.s32.totalorder %s93, %s94
    %p106 = scmp.eq.s32.totalorder %s21, 1
    %p107 = por %p105, %p106
    %p109 = scmp.ne.s32.totalorder %s94, %s108
    %p110 = scmp.eq.s32.totalorder %s21, 0
    %p111 = por %p109, %p110
    %s113 = sadd.s32 %s112, 1
    %p116 = scmp.eq.s32.totalorder %s15, 1
    %p117 = scmp.ne.s32.totalorder %s112, %s114
    %p118 = scmp.eq.s32.totalorder %s15, 0
    %p119 = por %p117, %p118
    %p120 = scmp.ne.s32.totalorder %s112, %s114
    %p121 = scmp.eq.s32.totalorder %s20, 1
    %p122 = por %p120, %p121
    %p123 = scmp.ne.s32.totalorder %s114, %s115
    %p124 = scmp.eq.s32.totalorder %s20, 0
    %p125 = por %p123, %p124
    %p126 = scmp.ne.s32.totalorder %s114, %s115
    %p127 = scmp.eq.s32.totalorder %s21, 1
    %p128 = por %p126, %p127
    %p130 = scmp.ne.s32.totalorder %s115, %s129
    %p131 = scmp.eq.s32.totalorder %s21, 0
    %p132 = por %p130, %p131
    %s134 = sadd.s32 %s133, 1
    %p137 = scmp.eq.s32.totalorder %s15, 1
    %p138 = scmp.ne.s32.totalorder %s133, %s135
    %p139 = scmp.eq.s32.totalorder %s15, 0
    %p140 = por %p138, %p139
    %p141 = scmp.ne.s32.totalorder %s133, %s135
    %p142 = scmp.eq.s32.totalorder %s20, 1
    %p143 = por %p141, %p142
    %p144 = scmp.ne.s32.totalorder %s135, %s136
    %p145 = scmp.eq.s32.totalorder %s20, 0
    %p146 = por %p144, %p145
    %p147 = scmp.ne.s32.totalorder %s135, %s136
    %p148 = scmp.eq.s32.totalorder %s21, 1
    %p149 = por %p147, %p148
    %p151 = scmp.ne.s32.totalorder %s136, %s150
    %p152 = scmp.eq.s32.totalorder %s21, 0
    %p153 = por %p151, %p152
    %s155 = sadd.s32 %s154, 1
    %p158 = scmp.eq.s32.totalorder %s15, 1
    %p159 = scmp.ne.s32.totalorder %s154, %s156
    %p160 = scmp.eq.s32.totalorder %s15, 0
    %p161 = por %p159, %p160
    %p162 = scmp.ne.s32.totalorder %s154, %s156
    %p163 = scmp.eq.s32.totalorder %s20, 1
    %p164 = por %p162, %p163
    %p165 = scmp.ne.s32.totalorder %s156, %s157
    %p166 = scmp.eq.s32.totalorder %s20, 0
    %p167 = por %p165, %p166
    %p168 = scmp.ne.s32.totalorder %s156, %s157
    %p169 = scmp.eq.s32.totalorder %s21, 1
    %p170 = por %p168, %p169
    %p172 = scmp.ne.s32.totalorder %s157, %s171
    %p173 = scmp.eq.s32.totalorder %s21, 0
    %p174 = por %p172, %p173
    %s175 = ssub.s32 %s15, %s22
    %p176 = scmp.eq.s32.totalorder %s175, 0
    %s178 = sadd.s32 %s177, 1
    %s179 = scalar_select %p176, %s177, %s178
    %p182 = pneg %p176
    %p183 = scmp.eq.s32.totalorder %s15, 1
    %p184 = por %p182, %p183
    %p185 = scmp.ne.s32.totalorder %s177, %s180
    %p186 = scmp.eq.s32.totalorder %s15, 0
    %p187 = por %p185, %p186
    %p188 = scmp.ne.s32.totalorder %s177, %s180
    %p189 = scmp.eq.s32.totalorder %s20, 1
    %p190 = por %p188, %p189
    %p191 = scmp.ne.s32.totalorder %s180, %s181
    %p192 = scmp.eq.s32.totalorder %s20, 0
    %p193 = por %p191, %p192
    %p194 = scmp.ne.s32.totalorder %s180, %s181
    %p195 = scmp.eq.s32.totalorder %s21, 1
    %p196 = por %p194, %p195
    %p198 = scmp.ne.s32.totalorder %s181, %s197
    %p199 = scmp.eq.s32.totalorder %s21, 0
    %p200 = por %p198, %p199
    %s201 = ssub.s32 %s15, %s22
    %p202 = scmp.eq.s32.totalorder %s201, 0
    %s204 = sadd.s32 %s203, 1
    %s205 = scalar_select %p202, %s203, %s204
    %p208 = pneg %p202
    %p209 = scmp.eq.s32.totalorder %s15, 1
    %p210 = por %p208, %p209
    %p211 = scmp.ne.s32.totalorder %s203, %s206
    %p212 = scmp.eq.s32.totalorder %s15, 0
    %p213 = por %p211, %p212
    %p214 = scmp.ne.s32.totalorder %s203, %s206
    %p215 = scmp.eq.s32.totalorder %s20, 1
    %p216 = por %p214, %p215
    %p217 = scmp.ne.s32.totalorder %s206, %s207
    %p218 = scmp.eq.s32.totalorder %s20, 0
    %p219 = por %p217, %p218
    %p220 = scmp.ne.s32.totalorder %s206, %s207
    %p221 = scmp.eq.s32.totalorder %s21, 1
    %p222 = por %p220, %p221
    %p224 = scmp.ne.s32.totalorder %s207, %s223
    %p225 = scmp.eq.s32.totalorder %s21, 0
    %p226 = por %p224, %p225
    %p227 = scmp.le.s32.totalorder 1, %s15
    %p228 = scmp.lt.s32.totalorder %s15, 3
    %p229 = pnand %p227, %p228
    %p230 = pneg %p229
    // Predicated region
    $region9: #{_lambda_.2} parent=5 // pred_check
      _
    $region10: #{_lambda_.2} parent=5 // pred_check_branch
      %232 = sbr.rel (%p229) target = $region12
    $region11: #{_lambda_.2} parent=5 // pred_region
      %s233 = ssub.s32 %s15, 1
      // Predicated region
      $region13: #{_lambda_.2} parent=11 // pred_check
        %p234 = pneg %p62
      $region14: #{_lambda_.2} parent=11 // pred_check_branch
        %236 = sbr.rel (%p234) target = $region16
      $region15: #{_lambda_.2} parent=11 // pred_region
        _
      $region16: #{_lambda_.2} parent=11 // pred_fallthru
        _
      // Predicated region
      $region17: #{_lambda_.2} parent=11 // pred_check
        %p237 = pneg %p83
      $region18: #{_lambda_.2} parent=11 // pred_check_branch
        %239 = sbr.rel (%p237) target = $region20
      $region19: #{_lambda_.2} parent=11 // pred_region
        _
      $region20: #{_lambda_.2} parent=11 // pred_fallthru
        _
      // Predicated region
      $region21: #{_lambda_.2} parent=11 // pred_check
        %p240 = pneg %p104
      $region22: #{_lambda_.2} parent=11 // pred_check_branch
        %242 = sbr.rel (%p240) target = $region24
      $region23: #{_lambda_.2} parent=11 // pred_region
        _
      $region24: #{_lambda_.2} parent=11 // pred_fallthru
        _
      // Predicated region
      $region25: #{_lambda_.2} parent=11 // pred_check
        %p243 = pneg %p125
      $region26: #{_lambda_.2} parent=11 // pred_check_branch
        %245 = sbr.rel (%p243) target = $region28
      $region27: #{_lambda_.2} parent=11 // pred_region
        _
      $region28: #{_lambda_.2} parent=11 // pred_fallthru
        _
      // Predicated region
      $region29: #{_lambda_.2} parent=11 // pred_check
        %p246 = pneg %p146
      $region30: #{_lambda_.2} parent=11 // pred_check_branch
        %248 = sbr.rel (%p246) target = $region32
      $region31: #{_lambda_.2} parent=11 // pred_region
        _
      $region32: #{_lambda_.2} parent=11 // pred_fallthru
        _
      // Predicated region
      $region33: #{_lambda_.2} parent=11 // pred_check
        %p249 = pneg %p167
      $region34: #{_lambda_.2} parent=11 // pred_check_branch
        %251 = sbr.rel (%p249) target = $region36
      $region35: #{_lambda_.2} parent=11 // pred_region
        _
      $region36: #{_lambda_.2} parent=11 // pred_fallthru
        _
    $region12: #{_lambda_.2} parent=5 // pred_fallthru
      _
    %p252 = scmp.lt.s32.totalorder %s15, 2
    // Predicated region
    $region37: #{_lambda_.2} parent=5 // pred_check
      %p253 = pneg %p252
    $region38: #{_lambda_.2} parent=5 // pred_check_branch
      %255 = sbr.rel (%p253) target = $region40
    $region39: #{_lambda_.2} parent=5 // pred_region
      // Predicated region
      $region41: #{_lambda_.2} parent=39 // pred_check
        %p256 = pneg %p35
      $region42: #{_lambda_.2} parent=39 // pred_check_branch
        %258 = sbr.rel (%p256) target = $region44
      $region43: #{_lambda_.2} parent=39 // pred_region
        %p259 = scmp.lt.s32.totalorder %s15, 1
        %s260 = scalar_select %p259, %s15, 1
        %s261 = smul.addr %s260, 8
        %s262 = scalar_lea.vmem %s0, %s261
      $region44: #{_lambda_.2} parent=39 // pred_fallthru
        _
    $region40: #{_lambda_.2} parent=5 // pred_fallthru
      _
    %p263 = scmp.le.s32.totalorder 1, %s15
    %p264 = scmp.lt.s32.totalorder %s15, 3
    %p265 = pnand %p263, %p264
    %p266 = pneg %p265
    // Predicated region
    $region45: #{_lambda_.2} parent=5 // pred_check
      _
    $region46: #{_lambda_.2} parent=5 // pred_check_branch
      %268 = sbr.rel (%p265) target = $region48
    $region47: #{_lambda_.2} parent=5 // pred_region
      %s269 = ssub.s32 %s15, 1
      %p270 = scmp.lt.s32.totalorder %s20, 1
      %s271 = scalar_select %p270, %s20, 1
      %s272 = smul.addr %s271, 8
      %s273 = scalar_lea.vmem %s0, %s272
      %p274 = pneg %p41
      %p275 = pneg %p38
      %p276 = pneg %p62
      %p277 = pneg %p59
      %p278 = pneg %p83
      %p279 = pneg %p80
      %p280 = pneg %p104
      %p281 = pneg %p101
      %p282 = pneg %p125
      %p283 = pneg %p122
      %p284 = pneg %p146
      %p285 = pneg %p143
      %p286 = pneg %p167
      %p287 = pneg %p164
      %p288 = pneg %p193
      %p289 = pneg %p190
      %p290 = scmp.lt.s32.totalorder %s20, 1
      %s291 = scalar_select %p290, %s20, 1
      %s292 = smul.addr %s291, 2
      %s293 = smul.addr %s292, 4
      %s294 = scalar_lea.vmem %s7, %s293
      %p295 = pneg %p219
      %p296 = pneg %p216
      %p297 = scmp.lt.s32.totalorder %s20, 1
      %s298 = scalar_select %p297, %s20, 1
      %s299 = smul.addr %s298, 8
      %s300 = scalar_lea.vmem %s8, %s299
      %p301 = scmp.lt.s32.totalorder %s20, 1
      %s302 = scalar_select %p301, %s20, 1
      %s303 = smul.addr %s302, 8
      %s304 = scalar_lea.vmem %s0, %s303
      %p305 = scmp.lt.s32.totalorder %s20, 1
      %s306 = scalar_select %p305, %s20, 1
      %s307 = smul.addr %s306, 2
      %s308 = smul.addr %s307, 4
      %s309 = scalar_lea.vmem %s7, %s308
      %p310 = scmp.lt.s32.totalorder %s20, 1
      %s311 = scalar_select %p310, %s20, 1
      %s312 = smul.addr %s311, 8
      %s313 = scalar_lea.vmem %s8, %s312
      %v315 = vld [vmem:[%s304] sm:$0xff]
      %v316 = vpack.c.bf16 %v315, %v315
      %v317 = vld [vmem:[%s1] sm:$0xff]
      %v318 = vld [vmem:[%s1 + $0x8] sm:$0xff]
      %v319 = vld [vmem:[%s1 + $0x10] sm:$0xf]
      %v320 = vld [vmem:[%s1 + $0x14] sm:$0xff]
      %v321 = vld [vmem:[%s1 + $0x1c] sm:$0xff]
      %v322 = vld [vmem:[%s1 + $0x24] sm:$0xf]
      %v323 = vld [vmem:[%s1 + $0x28] sm:$0xff]
      %v324 = vld [vmem:[%s1 + $0x30] sm:$0xff]
      %v325 = vld [vmem:[%s1 + $0x38] sm:$0xf]
      %v326 = vld [vmem:[%s1 + $0x3c] sm:$0xff]
      %v327 = vld [vmem:[%s1 + $0x44] sm:$0xff]
      %v328 = vld [vmem:[%s1 + $0x4c] sm:$0xf]
      %v329 = vld [vmem:[%s1 + $0x50] sm:$0xff]
      %v330 = vld [vmem:[%s1 + $0x58] sm:$0xff]
      %v331 = vld [vmem:[%s1 + $0x60] sm:$0xf]
      %v332 = vld [vmem:[%s1 + $0x64] sm:$0xff]
      %v333 = vld [vmem:[%s1 + $0x6c] sm:$0xff]
      %v334 = vld [vmem:[%s1 + $0x74] sm:$0xf]
      %v335 = vld [vmem:[%s2] sm:$0x1f]
      %v337 = vlaneseq
      %v338 = vshrl.u32 %v337, 7
      %v339 = vsub.s32 0, %v338
      %v340 = vrot.slane %v335, %v339
      %v341 = vlaneseq
      %v342 = vshrl.u32 %v341, 7
      %v343 = vsub.s32 1, %v342
      %v344 = vrot.slane %v335, %v343
      %v345 = vlaneseq
      %v346 = vshrl.u32 %v345, 7
      %v347 = vsub.s32 2, %v346
      %v348 = vrot.slane %v335, %v347
      %v349 = vlaneseq
      %v350 = vshrl.u32 %v349, 7
      %v351 = vsub.s32 3, %v350
      %v352 = vrot.slane %v335, %v351
      %v353 = vlaneseq
      %v354 = vshrl.u32 %v353, 7
      %v355 = vsub.s32 4, %v354
      %v356 = vrot.slane %v335, %v355
      %v380 = vunpack.c.l.b16 %v317
      %v381 = vunpack.c.h.b16 %v317
      %v382 = vunpack.c.l.b16 %v318
      %v383 = vunpack.c.h.b16 %v318
      %v384 = vunpack.c.l.b16 %v319
      %v385 = vunpack.c.l.b16 %v320
      %v386 = vunpack.c.h.b16 %v320
      %v387 = vunpack.c.l.b16 %v321
      %v388 = vunpack.c.h.b16 %v321
      %v389 = vunpack.c.l.b16 %v322
      %v390 = vunpack.c.l.b16 %v323
      %v391 = vunpack.c.h.b16 %v323
      %v392 = vunpack.c.l.b16 %v324
      %v393 = vunpack.c.h.b16 %v324
      %v394 = vunpack.c.l.b16 %v325
      %v395 = vunpack.c.l.b16 %v326
      %v396 = vunpack.c.h.b16 %v326
      %v397 = vunpack.c.l.b16 %v327
      %v398 = vunpack.c.h.b16 %v327
      %v399 = vunpack.c.l.b16 %v328
      %v400 = vunpack.c.l.b16 %v329
      %v401 = vunpack.c.h.b16 %v329
      %v402 = vunpack.c.l.b16 %v330
      %v403 = vunpack.c.h.b16 %v330
      %v404 = vunpack.c.l.b16 %v331
      %v405 = vunpack.c.l.b16 %v332
      %v406 = vunpack.c.h.b16 %v332
      %v407 = vunpack.c.l.b16 %v333
      %v408 = vunpack.c.h.b16 %v333
      %v409 = vunpack.c.l.b16 %v334
      %v410 = vpack.c.b16 %v385, %v380
      %v411 = vpack.c.b16 %v386, %v381
      %v412 = vpack.c.b16 %v387, %v382
      %v413 = vpack.c.b16 %v388, %v383
      %v414 = vpack.c.b16 %v389, %v384
      %v415 = vpack.c.b16 %v395, %v390
      %v416 = vpack.c.b16 %v396, %v391
      %v417 = vpack.c.b16 %v397, %v392
      %v418 = vpack.c.b16 %v398, %v393
      %v419 = vpack.c.b16 %v399, %v394
      %v420 = vpack.c.b16 %v405, %v400
      %v421 = vpack.c.b16 %v406, %v401
      %v422 = vpack.c.b16 %v407, %v402
      %v423 = vpack.c.b16 %v408, %v403
      %v424 = vpack.c.b16 %v409, %v404
      %vm440 = vcmask 392192
      %v442 = vsel %vm440, %v316, 0
      %444 = vmatprep.subr.bf16.mxu0 %v411
      %445 = vmatpush1.bf16.msra.mxu0 %v410
      %446 = vmatprep.subr.bf16.mxu0 %v416
      %447 = vmatpush1.bf16.msra.mxu0 %v415
      %448 = vmatprep.subr.bf16.mxu0 %v421
      %449 = vmatpush1.bf16.msra.mxu0 %v420
      %450 = vmatprep.subr.bf16.mxu0 0
      %451 = vmatpush1.bf16.msra.mxu0 0
      %452 = vmatprep.subr.bf16.mxu0 0
      %453 = vmatpush1.bf16.msra.mxu0 0
      %454 = vmatprep.subr.bf16.mxu0 0
      %455 = vmatpush1.bf16.msra.mxu0 0
      %456 = vmatprep.subr.bf16.mxu0 0
      %457 = vmatpush1.bf16.msra.mxu0 0
      %458 = vmatprep.subr.bf16.mxu0 0
      %459 = vmatpush1.bf16.msra.mxu0 0
      %460 = vmatprep.subr.bf16.mxu0 0
      %461 = vmatpush1.bf16.msra.mxu0 0
      %462 = vmatprep.subr.bf16.mxu0 0
      %463 = vmatpush1.bf16.msra.mxu0 0
      %464 = vmatprep.subr.bf16.mxu0 0
      %465 = vmatpush1.bf16.msra.mxu0 0
      %466 = vmatprep.subr.bf16.mxu0 0
      %467 = vmatpush1.bf16.msra.mxu0 0
      %468 = vmatprep.subr.bf16.mxu0 0
      %469 = vmatpush1.bf16.msra.mxu0 0
      %470 = vmatprep.subr.bf16.mxu0 0
      %471 = vmatpush1.bf16.msra.mxu0 0
      %472 = vmatprep.subr.bf16.mxu0 0
      %473 = vmatpush1.bf16.msra.mxu0 0
      %474 = vmatprep.subr.bf16.mxu0 0
      %475 = vmatpush1.bf16.msra.mxu0 0
      %476 = vmatprep.mubr.bf16.mxu0 0
      %477 = vmatmul.mubr.bf16.gmra.mrb[0].mxu0 %v442
      %v478 = vpop.f32.mrb[0].mxu0
      %v479 = vadd.f32 %v340, %v478
      %v480 = vpop.f32.mrb[0].mxu0
      %v481 = vadd.f32 %v344, %v480
      %v482 = vpop.f32.mrb[0].mxu0
      %v483 = vpop.f32.mrb[0].mxu0
      %484 = vdwg.mxu0
      %485 = vmatprep.subr.bf16.mxu0 %v413
      %486 = vmatpush1.bf16.msra.mxu0 %v412
      %487 = vmatprep.subr.bf16.mxu0 %v418
      %488 = vmatpush1.bf16.msra.mxu0 %v417
      %489 = vmatprep.subr.bf16.mxu0 %v423
      %490 = vmatpush1.bf16.msra.mxu0 %v422
      %491 = vmatprep.subr.bf16.mxu0 0
      %492 = vmatpush1.bf16.msra.mxu0 0
      %493 = vmatprep.subr.bf16.mxu0 0
      %494 = vmatpush1.bf16.msra.mxu0 0
      %495 = vmatprep.subr.bf16.mxu0 0
      %496 = vmatpush1.bf16.msra.mxu0 0
      %497 = vmatprep.subr.bf16.mxu0 0
      %498 = vmatpush1.bf16.msra.mxu0 0
      %499 = vmatprep.subr.bf16.mxu0 0
      %500 = vmatpush1.bf16.msra.mxu0 0
      %501 = vmatprep.subr.bf16.mxu0 0
      %502 = vmatpush1.bf16.msra.mxu0 0
      %503 = vmatprep.subr.bf16.mxu0 0
      %504 = vmatpush1.bf16.msra.mxu0 0
      %505 = vmatprep.subr.bf16.mxu0 0
      %506 = vmatpush1.bf16.msra.mxu0 0
      %507 = vmatprep.subr.bf16.mxu0 0
      %508 = vmatpush1.bf16.msra.mxu0 0
      %509 = vmatprep.subr.bf16.mxu0 0
      %510 = vmatpush1.bf16.msra.mxu0 0
      %511 = vmatprep.subr.bf16.mxu0 0
      %512 = vmatpush1.bf16.msra.mxu0 0
      %513 = vmatprep.subr.bf16.mxu0 0
      %514 = vmatpush1.bf16.msra.mxu0 0
      %515 = vmatprep.subr.bf16.mxu0 0
      %516 = vmatpush1.bf16.msra.mxu0 0
      %517 = vmatprep.mubr.bf16.mxu0 0
      %518 = vmatmul.mubr.bf16.gmra.mrb[0].mxu0 %v442
      %v519 = vpop.f32.mrb[0].mxu0
      %v520 = vadd.f32 %v348, %v519
      %v521 = vpop.f32.mrb[0].mxu0
      %v522 = vadd.f32 %v352, %v521
      %v523 = vpop.f32.mrb[0].mxu0
      %v524 = vpop.f32.mrb[0].mxu0
      %525 = vdwg.mxu0
      %526 = vmatprep.subr.bf16.mxu0 0
      %527 = vmatpush1.bf16.msra.mxu0 %v414
      %528 = vmatprep.subr.bf16.mxu0 0
      %529 = vmatpush1.bf16.msra.mxu0 %v419
      %530 = vmatprep.subr.bf16.mxu0 0
      %531 = vmatpush1.bf16.msra.mxu0 %v424
      %532 = vmatprep.subr.bf16.mxu0 0
      %533 = vmatpush1.bf16.msra.mxu0 0
      %534 = vmatprep.subr.bf16.mxu0 0
      %535 = vmatpush1.bf16.msra.mxu0 0
      %536 = vmatprep.subr.bf16.mxu0 0
      %537 = vmatpush1.bf16.msra.mxu0 0
      %538 = vmatprep.subr.bf16.mxu0 0
      %539 = vmatpush1.bf16.msra.mxu0 0
      %540 = vmatprep.subr.bf16.mxu0 0
      %541 = vmatpush1.bf16.msra.mxu0 0
      %542 = vmatprep.subr.bf16.mxu0 0
      %543 = vmatpush1.bf16.msra.mxu0 0
      %544 = vmatprep.subr.bf16.mxu0 0
      %545 = vmatpush1.bf16.msra.mxu0 0
      %546 = vmatprep.subr.bf16.mxu0 0
      %547 = vmatpush1.bf16.msra.mxu0 0
      %548 = vmatprep.subr.bf16.mxu0 0
      %549 = vmatpush1.bf16.msra.mxu0 0
      %550 = vmatprep.subr.bf16.mxu0 0
      %551 = vmatpush1.bf16.msra.mxu0 0
      %552 = vmatprep.subr.bf16.mxu0 0
      %553 = vmatpush1.bf16.msra.mxu0 0
      %554 = vmatprep.subr.bf16.mxu0 0
      %555 = vmatpush1.bf16.msra.mxu0 0
      %556 = vmatprep.subr.bf16.mxu0 0
      %557 = vmatpush1.bf16.msra.mxu0 0
      %558 = vmatprep.mubr.bf16.mxu0 0
      %559 = vmatmul.mubr.bf16.gmra.mrb[0].mxu0 %v442
      %v560 = vpop.f32.mrb[0].mxu0
      %v561 = vadd.f32 %v356, %v560
      %v562 = vpop.f32.mrb[0].mxu0
      %v563 = vpop.f32.mrb[0].mxu0
      %v564 = vpop.f32.mrb[0].mxu0
      %565 = vdwg.mxu0
      %v566 = vmul.f32 %v520, 0.5
      %v567 = vmul.f32 %v522, 0.5
      %v568 = vmul.f32 %v561, 0.5
      %v569 = vtanh.pop %v566
      %v570 = vtanh.pop %v567
      %v571 = vtanh.pop %v568
      %v572 = vadd.f32 %v569, 1.0
      %v573 = vadd.f32 %v570, 1.0
      %v574 = vadd.f32 %v571, 1.0
      %v575 = vmul.f32 %v572, 0.5
      %v576 = vmul.f32 %v573, 0.5
      %v577 = vmul.f32 %v574, 0.5
      %581 = vrot.lane.b32.xlu0 %v575, 64
      %v582 = vpop.permute.xlu0 %581
      %583 = vrot.lane.b32.xlu0 %v576, 64
      %v584 = vpop.permute.xlu0 %583
      %585 = vrot.lane.b32.xlu0 %v577, 64
      %v586 = vpop.permute.xlu0 %585
      %vm587 = vcmask 523264
      %v588 = vsel %vm587, %v582, %v584
      %v589 = vsel %vm587, %v584, %v586
      %v593 = vmul.f32 %v479, %v588
      %v594 = vmul.f32 %v481, %v589
      %v595 = vmul.f32 %v520, %v586
      %v596 = vpack.c.bf16 %v593, %v593
      %v597 = vpack.c.bf16 %v594, %v594
      %v598 = vpack.c.bf16 %v595, %v595
      %v600 = vshrl.u32 %v596, 16
      %v602 = vrot.slane %v600, 7
      %v603 = vshll.u32 %v596, 16
      %v605 = vor.u32 %v602, %v603
      %v607 = vshrl.u32 %v597, 16
      %v609 = vrot.slane %v607, 7
      %v610 = vshll.u32 %v597, 16
      %v612 = vor.u32 %v609, %v610
      %v614 = vshrl.u32 %v598, 16
      %v616 = vrot.slane %v614, 7
      %v617 = vshll.u32 %v598, 16
      %v619 = vor.u32 %v616, %v617
      %vm623 = vcmask 1040384
      %vm624 = vsmask.f32 256
      %vm625 = vmand %vm623, %vm624
      %v626 = vsel %vm625, 0, %v605
      %v627 = vsel %vm625, 0, %v612
      %v628 = vsel %vm625, 0, %v619
      %v629 = vld [vmem:[%s3] sm:$0xff]
      %v630 = vld [vmem:[%s3 + $0x8] sm:$0xff]
      %v631 = vld [vmem:[%s3 + $0x10] sm:$0xff]
      %v632 = vld [vmem:[%s3 + $0x18] sm:$0xff]
      %v633 = vld [vmem:[%s3 + $0x20] sm:$0xff]
      %v634 = vld [vmem:[%s3 + $0x28] sm:$0xff]
      %v635 = vld [vmem:[%s3 + $0x30] sm:$0xff]
      %v636 = vld [vmem:[%s3 + $0x38] sm:$0xff]
      %v637 = vld [vmem:[%s3 + $0x40] sm:$0xff]
      %v638 = vld [vmem:[%s3 + $0x48] sm:$0xff]
      %v639 = vld [vmem:[%s3 + $0x50] sm:$0xff]
      %v640 = vld [vmem:[%s3 + $0x58] sm:$0xff]
      %v641 = vld [vmem:[%s3 + $0x60] sm:$0xff]
      %v642 = vld [vmem:[%s3 + $0x68] sm:$0xff]
      %v643 = vld [vmem:[%s3 + $0x70] sm:$0xff]
      %v644 = vld [vmem:[%s3 + $0x78] sm:$0xff]
      %v645 = vld [vmem:[%s3 + $0x80] sm:$0xff]
      %v646 = vld [vmem:[%s3 + $0x88] sm:$0xff]
      %v647 = vld [vmem:[%s3 + $0x90] sm:$0xff]
      %v648 = vld [vmem:[%s3 + $0x98] sm:$0xff]
      %v649 = vld [vmem:[%s3 + $0xa0] sm:$0xff]
      %v650 = vld [vmem:[%s3 + $0xa8] sm:$0xff]
      %v651 = vld [vmem:[%s3 + $0xb0] sm:$0xff]
      %v652 = vld [vmem:[%s3 + $0xb8] sm:$0xff]
      %v653 = vld [vmem:[%s3 + $0xc0] sm:$0xff]
      %v654 = vld [vmem:[%s3 + $0xc8] sm:$0xff]
      %v655 = vld [vmem:[%s3 + $0xd0] sm:$0xff]
      %v656 = vld [vmem:[%s3 + $0xd8] sm:$0xff]
      %v657 = vld [vmem:[%s3 + $0xe0] sm:$0xff]
      %v658 = vld [vmem:[%s3 + $0xe8] sm:$0xff]
      %v659 = vld [vmem:[%s3 + $0xf0] sm:$0xff]
      %v660 = vld [vmem:[%s3 + $0xf8] sm:$0xff]
      %v661 = vld [vmem:[%s3 + $0x100] sm:$0xff]
      %v662 = vld [vmem:[%s3 + $0x108] sm:$0xff]
      %v663 = vld [vmem:[%s3 + $0x110] sm:$0xff]
      %v664 = vld [vmem:[%s3 + $0x118] sm:$0xff]
      %v665 = vld [vmem:[%s3 + $0x120] sm:$0xff]
      %v666 = vld [vmem:[%s3 + $0x128] sm:$0xff]
      %v667 = vld [vmem:[%s3 + $0x130] sm:$0xff]
      %v668 = vld [vmem:[%s3 + $0x138] sm:$0xff]
      %s669 = scalar_lea.vmem %s3, 320
      %v670 = vld [vmem:[%s669] sm:$0xff]
      %v671 = vld [vmem:[%s669 + $0x8] sm:$0xff]
      %v672 = vld [vmem:[%s669 + $0x10] sm:$0xff]
      %v673 = vld [vmem:[%s669 + $0x18] sm:$0xff]
      %v674 = vld [vmem:[%s669 + $0x20] sm:$0xff]
      %v675 = vld [vmem:[%s669 + $0x28] sm:$0xff]
      %v676 = vld [vmem:[%s669 + $0x30] sm:$0xff]
      %v677 = vld [vmem:[%s669 + $0x38] sm:$0xff]
      %v678 = vld [vmem:[%s669 + $0x40] sm:$0xff]
      %v679 = vld [vmem:[%s669 + $0x48] sm:$0xff]
      %v680 = vld [vmem:[%s669 + $0x50] sm:$0xff]
      %v681 = vld [vmem:[%s669 + $0x58] sm:$0xff]
      %v682 = vld [vmem:[%s669 + $0x60] sm:$0xff]
      %v683 = vld [vmem:[%s669 + $0x68] sm:$0xff]
      %v684 = vld [vmem:[%s669 + $0x70] sm:$0xff]
      %v685 = vld [vmem:[%s669 + $0x78] sm:$0xff]
      %v686 = vld [vmem:[%s669 + $0x80] sm:$0xff]
      %v687 = vld [vmem:[%s669 + $0x88] sm:$0xff]
      %v688 = vld [vmem:[%s669 + $0x90] sm:$0xff]
      %v689 = vld [vmem:[%s669 + $0x98] sm:$0xff]
      %v690 = vld [vmem:[%s669 + $0xa0] sm:$0xff]
      %v691 = vld [vmem:[%s669 + $0xa8] sm:$0xff]
      %v692 = vld [vmem:[%s669 + $0xb0] sm:$0xff]
      %v693 = vld [vmem:[%s669 + $0xb8] sm:$0xff]
      %v694 = vld [vmem:[%s669 + $0xc0] sm:$0xff]
      %v695 = vld [vmem:[%s669 + $0xc8] sm:$0xff]
      %v696 = vld [vmem:[%s669 + $0xd0] sm:$0xff]
      %v697 = vld [vmem:[%s669 + $0xd8] sm:$0xff]
      %v698 = vld [vmem:[%s669 + $0xe0] sm:$0xff]
      %v699 = vld [vmem:[%s669 + $0xe8] sm:$0xff]
      %v700 = vld [vmem:[%s669 + $0xf0] sm:$0xff]
      %v701 = vld [vmem:[%s669 + $0xf8] sm:$0xff]
      %v702 = vld [vmem:[%s669 + $0x100] sm:$0xff]
      %v703 = vld [vmem:[%s669 + $0x108] sm:$0xff]
      %v704 = vld [vmem:[%s669 + $0x110] sm:$0xff]
      %v705 = vld [vmem:[%s669 + $0x118] sm:$0xff]
      %v706 = vld [vmem:[%s669 + $0x120] sm:$0xff]
      %v707 = vld [vmem:[%s669 + $0x128] sm:$0xff]
      %v708 = vld [vmem:[%s669 + $0x130] sm:$0xff]
      %v709 = vld [vmem:[%s669 + $0x138] sm:$0xff]
      %v750 = vunpack.c.l.b16 %v670
      %v751 = vunpack.c.h.b16 %v670
      %v752 = vunpack.c.l.b16 %v671
      %v753 = vunpack.c.h.b16 %v671
      %v754 = vunpack.c.l.b16 %v672
      %v755 = vunpack.c.h.b16 %v672
      %v756 = vunpack.c.l.b16 %v673
      %v757 = vunpack.c.h.b16 %v673
      %v758 = vunpack.c.l.b16 %v674
      %v759 = vunpack.c.h.b16 %v674
      %v760 = vunpack.c.l.b16 %v675
      %v761 = vunpack.c.h.b16 %v675
      %v762 = vunpack.c.l.b16 %v676
      %v763 = vunpack.c.h.b16 %v676
      %v764 = vunpack.c.l.b16 %v677
      %v765 = vunpack.c.h.b16 %v677
      %v766 = vunpack.c.l.b16 %v678
      %v767 = vunpack.c.h.b16 %v678
      %v768 = vunpack.c.l.b16 %v679
      %v769 = vunpack.c.h.b16 %v679
      %v770 = vunpack.c.l.b16 %v680
      %v771 = vunpack.c.h.b16 %v680
      %v772 = vunpack.c.l.b16 %v681
      %v773 = vunpack.c.h.b16 %v681
      %v774 = vunpack.c.l.b16 %v682
      %v775 = vunpack.c.h.b16 %v682
      %v776 = vunpack.c.l.b16 %v683
      %v777 = vunpack.c.h.b16 %v683
      %v778 = vunpack.c.l.b16 %v684
      %v779 = vunpack.c.h.b16 %v684
      %v780 = vunpack.c.l.b16 %v685
      %v781 = vunpack.c.h.b16 %v685
      %v782 = vunpack.c.l.b16 %v686
      %v783 = vunpack.c.h.b16 %v686
      %v784 = vunpack.c.l.b16 %v687
      %v785 = vunpack.c.h.b16 %v687
      %v786 = vunpack.c.l.b16 %v688
      %v787 = vunpack.c.h.b16 %v688
      %v788 = vunpack.c.l.b16 %v689
      %v789 = vunpack.c.h.b16 %v689
      %v790 = vunpack.c.l.b16 %v690
      %v791 = vunpack.c.h.b16 %v690
      %v792 = vunpack.c.l.b16 %v691
      %v793 = vunpack.c.h.b16 %v691
      %v794 = vunpack.c.l.b16 %v692
      %v795 = vunpack.c.h.b16 %v692
      %v796 = vunpack.c.l.b16 %v693
      %v797 = vunpack.c.h.b16 %v693
      %v798 = vunpack.c.l.b16 %v694
      %v799 = vunpack.c.h.b16 %v694
      %v800 = vunpack.c.l.b16 %v695
      %v801 = vunpack.c.h.b16 %v695
      %v802 = vunpack.c.l.b16 %v696
      %v803 = vunpack.c.h.b16 %v696
      %v804 = vunpack.c.l.b16 %v697
      %v805 = vunpack.c.h.b16 %v697
      %v806 = vunpack.c.l.b16 %v698
      %v807 = vunpack.c.h.b16 %v698
      %v808 = vunpack.c.l.b16 %v699
      %v809 = vunpack.c.h.b16 %v699
      %v810 = vunpack.c.l.b16 %v700
      %v811 = vunpack.c.h.b16 %v700
      %v812 = vunpack.c.l.b16 %v701
      %v813 = vunpack.c.h.b16 %v701
      %v814 = vunpack.c.l.b16 %v702
      %v815 = vunpack.c.h.b16 %v702
      %v816 = vunpack.c.l.b16 %v703
      %v817 = vunpack.c.h.b16 %v703
      %v818 = vunpack.c.l.b16 %v704
      %v819 = vunpack.c.h.b16 %v704
      %v820 = vunpack.c.l.b16 %v705
      %v821 = vunpack.c.h.b16 %v705
      %v822 = vunpack.c.l.b16 %v706
      %v823 = vunpack.c.h.b16 %v706
      %v824 = vunpack.c.l.b16 %v707
      %v825 = vunpack.c.h.b16 %v707
      %v826 = vunpack.c.l.b16 %v708
      %v827 = vunpack.c.h.b16 %v708
      %v828 = vunpack.c.l.b16 %v709
      %v829 = vunpack.c.h.b16 %v709
      %v830 = vpack.c.b16 %v752, %v750
      %v831 = vpack.c.b16 %v753, %v751
      %v832 = vpack.c.b16 %v756, %v754
      %v833 = vpack.c.b16 %v757, %v755
      %v834 = vpack.c.b16 %v760, %v758
      %v835 = vpack.c.b16 %v761, %v759
      %v836 = vpack.c.b16 %v764, %v762
      %v837 = vpack.c.b16 %v765, %v763
      %v838 = vpack.c.b16 %v768, %v766
      %v839 = vpack.c.b16 %v769, %v767
      %v840 = vpack.c.b16 %v772, %v770
      %v841 = vpack.c.b16 %v773, %v771
      %v842 = vpack.c.b16 %v776, %v774
      %v843 = vpack.c.b16 %v777, %v775
      %v844 = vpack.c.b16 %v780, %v778
      %v845 = vpack.c.b16 %v781, %v779
      %v846 = vpack.c.b16 %v784, %v782
      %v847 = vpack.c.b16 %v785, %v783
      %v848 = vpack.c.b16 %v788, %v786
      %v849 = vpack.c.b16 %v789, %v787
      %v850 = vpack.c.b16 %v792, %v790
      %v851 = vpack.c.b16 %v793, %v791
      %v852 = vpack.c.b16 %v796, %v794
      %v853 = vpack.c.b16 %v797, %v795
      %v854 = vpack.c.b16 %v800, %v798
      %v855 = vpack.c.b16 %v801, %v799
      %v856 = vpack.c.b16 %v804, %v802
      %v857 = vpack.c.b16 %v805, %v803
      %v858 = vpack.c.b16 %v808, %v806
      %v859 = vpack.c.b16 %v809, %v807
      %v860 = vpack.c.b16 %v812, %v810
      %v861 = vpack.c.b16 %v813, %v811
      %v862 = vpack.c.b16 %v816, %v814
      %v863 = vpack.c.b16 %v817, %v815
      %v864 = vpack.c.b16 %v820, %v818
      %v865 = vpack.c.b16 %v821, %v819
      %v866 = vpack.c.b16 %v824, %v822
      %v867 = vpack.c.b16 %v825, %v823
      %v868 = vpack.c.b16 %v828, %v826
      %v869 = vpack.c.b16 %v829, %v827
      %v910 = vsel %vm587, %v598, 0
      %912 = vmatprep.subr.bf16.mxu0 %v831
      %913 = vmatpush1.bf16.msra.mxu0 %v830
      %914 = vmatprep.subr.bf16.mxu0 %v833
      %915 = vmatpush1.bf16.msra.mxu0 %v832
      %916 = vmatprep.subr.bf16.mxu0 %v835
      %917 = vmatpush1.bf16.msra.mxu0 %v834
      %918 = vmatprep.subr.bf16.mxu0 %v837
      %919 = vmatpush1.bf16.msra.mxu0 %v836
      %920 = vmatprep.subr.bf16.mxu0 %v839
      %921 = vmatpush1.bf16.msra.mxu0 %v838
      %922 = vmatprep.subr.bf16.mxu0 %v841
      %923 = vmatpush1.bf16.msra.mxu0 %v840
      %924 = vmatprep.subr.bf16.mxu0 %v843
      %925 = vmatpush1.bf16.msra.mxu0 %v842
      %926 = vmatprep.subr.bf16.mxu0 %v845
      %927 = vmatpush1.bf16.msra.mxu0 %v844
      %928 = vmatprep.subr.bf16.mxu0 %v847
      %929 = vmatpush1.bf16.msra.mxu0 %v846
      %930 = vmatprep.subr.bf16.mxu0 %v849
      %931 = vmatpush1.bf16.msra.mxu0 %v848
      %932 = vmatprep.subr.bf16.mxu0 %v851
      %933 = vmatpush1.bf16.msra.mxu0 %v850
      %934 = vmatprep.subr.bf16.mxu0 %v853
      %935 = vmatpush1.bf16.msra.mxu0 %v852
      %936 = vmatprep.subr.bf16.mxu0 %v855
      %937 = vmatpush1.bf16.msra.mxu0 %v854
      %938 = vmatprep.subr.bf16.mxu0 %v857
      %939 = vmatpush1.bf16.msra.mxu0 %v856
      %940 = vmatprep.subr.bf16.mxu0 %v859
      %941 = vmatpush1.bf16.msra.mxu0 %v858
      %942 = vmatprep.subr.bf16.mxu0 %v861
      %943 = vmatpush1.bf16.msra.mxu0 %v860
      %944 = vmatprep.mubr.bf16.mxu0 %v597
      %945 = vmatmul.mubr.bf16.gmra.mrb[0].mxu0 %v596
      %v946 = vpop.f32.mrb[0].mxu0
      %v947 = vadd.f32 0.0, %v946
      %v948 = vpop.f32.mrb[0].mxu0
      %v949 = vadd.f32 0.0, %v948
      %v950 = vpop.f32.mrb[0].mxu0
      %v951 = vpop.f32.mrb[0].mxu0
      %952 = vdwg.mxu0
      %953 = vmatprep.subr.bf16.mxu0 %v863
      %954 = vmatpush1.bf16.msra.mxu0 %v862
      %955 = vmatprep.subr.bf16.mxu0 %v865
      %956 = vmatpush1.bf16.msra.mxu0 %v864
      %957 = vmatprep.subr.bf16.mxu0 %v867
      %958 = vmatpush1.bf16.msra.mxu0 %v866
      %959 = vmatprep.subr.bf16.mxu0 %v869
      %960 = vmatpush1.bf16.msra.mxu0 %v868
      %961 = vmatprep.subr.bf16.mxu0 0
      %962 = vmatpush1.bf16.msra.mxu0 0
      %963 = vmatprep.subr.bf16.mxu0 0
      %964 = vmatpush1.bf16.msra.mxu0 0
      %965 = vmatprep.subr.bf16.mxu0 0
      %966 = vmatpush1.bf16.msra.mxu0 0
      %967 = vmatprep.subr.bf16.mxu0 0
      %968 = vmatpush1.bf16.msra.mxu0 0
      %969 = vmatprep.subr.bf16.mxu0 0
      %970 = vmatpush1.bf16.msra.mxu0 0
      %971 = vmatprep.subr.bf16.mxu0 0
      %972 = vmatpush1.bf16.msra.mxu0 0
      %973 = vmatprep.subr.bf16.mxu0 0
      %974 = vmatpush1.bf16.msra.mxu0 0
      %975 = vmatprep.subr.bf16.mxu0 0
      %976 = vmatpush1.bf16.msra.mxu0 0
      %977 = vmatprep.subr.bf16.mxu0 0
      %978 = vmatpush1.bf16.msra.mxu0 0
      %979 = vmatprep.subr.bf16.mxu0 0
      %980 = vmatpush1.bf16.msra.mxu0 0
      %981 = vmatprep.subr.bf16.mxu0 0
      %982 = vmatpush1.bf16.msra.mxu0 0
      %983 = vmatprep.subr.bf16.mxu0 0
      %984 = vmatpush1.bf16.msra.mxu0 0
      %985 = vmatprep.mubr.bf16.mxu0 0
      %986 = vmatmul.mubr.bf16.gmra.mrb[0].mxu0 %v910
      %v987 = vpop.f32.mrb[0].mxu0
      %v988 = vadd.f32 %v947, %v987
      %v989 = vpop.f32.mrb[0].mxu0
      %v990 = vadd.f32 %v949, %v989
      %v991 = vpop.f32.mrb[0].mxu0
      %v992 = vpop.f32.mrb[0].mxu0
      %993 = vdwg.mxu0
      %v1034 = vunpack.c.l.b16 %v629
      %v1035 = vunpack.c.h.b16 %v629
      %v1036 = vunpack.c.l.b16 %v630
      %v1037 = vunpack.c.h.b16 %v630
      %v1038 = vunpack.c.l.b16 %v631
      %v1039 = vunpack.c.h.b16 %v631
      %v1040 = vunpack.c.l.b16 %v632
      %v1041 = vunpack.c.h.b16 %v632
      %v1042 = vunpack.c.l.b16 %v633
      %v1043 = vunpack.c.h.b16 %v633
      %v1044 = vunpack.c.l.b16 %v634
      %v1045 = vunpack.c.h.b16 %v634
      %v1046 = vunpack.c.l.b16 %v635
      %v1047 = vunpack.c.h.b16 %v635
      %v1048 = vunpack.c.l.b16 %v636
      %v1049 = vunpack.c.h.b16 %v636
      %v1050 = vunpack.c.l.b16 %v637
      %v1051 = vunpack.c.h.b16 %v637
      %v1052 = vunpack.c.l.b16 %v638
      %v1053 = vunpack.c.h.b16 %v638
      %v1054 = vunpack.c.l.b16 %v639
      %v1055 = vunpack.c.h.b16 %v639
      %v1056 = vunpack.c.l.b16 %v640
      %v1057 = vunpack.c.h.b16 %v640
      %v1058 = vunpack.c.l.b16 %v641
      %v1059 = vunpack.c.h.b16 %v641
      %v1060 = vunpack.c.l.b16 %v642
      %v1061 = vunpack.c.h.b16 %v642
      %v1062 = vunpack.c.l.b16 %v643
      %v1063 = vunpack.c.h.b16 %v643
      %v1064 = vunpack.c.l.b16 %v644
      %v1065 = vunpack.c.h.b16 %v644
      %v1066 = vunpack.c.l.b16 %v645
      %v1067 = vunpack.c.h.b16 %v645
      %v1068 = vunpack.c.l.b16 %v646
      %v1069 = vunpack.c.h.b16 %v646
      %v1070 = vunpack.c.l.b16 %v647
      %v1071 = vunpack.c.h.b16 %v647
      %v1072 = vunpack.c.l.b16 %v648
      %v1073 = vunpack.c.h.b16 %v648
      %v1074 = vunpack.c.l.b16 %v649
      %v1075 = vunpack.c.h.b16 %v649
      %v1076 = vunpack.c.l.b16 %v650
      %v1077 = vunpack.c.h.b16 %v650
      %v1078 = vunpack.c.l.b16 %v651
      %v1079 = vunpack.c.h.b16 %v651
      %v1080 = vunpack.c.l.b16 %v652
      %v1081 = vunpack.c.h.b16 %v652
      %v1082 = vunpack.c.l.b16 %v653
      %v1083 = vunpack.c.h.b16 %v653
      %v1084 = vunpack.c.l.b16 %v654
      %v1085 = vunpack.c.h.b16 %v654
      %v1086 = vunpack.c.l.b16 %v655
      %v1087 = vunpack.c.h.b16 %v655
      %v1088 = vunpack.c.l.b16 %v656
      %v1089 = vunpack.c.h.b16 %v656
      %v1090 = vunpack.c.l.b16 %v657
      %v1091 = vunpack.c.h.b16 %v657
      %v1092 = vunpack.c.l.b16 %v658
      %v1093 = vunpack.c.h.b16 %v658
      %v1094 = vunpack.c.l.b16 %v659
      %v1095 = vunpack.c.h.b16 %v659
      %v1096 = vunpack.c.l.b16 %v660
      %v1097 = vunpack.c.h.b16 %v660
      %v1098 = vunpack.c.l.b16 %v661
      %v1099 = vunpack.c.h.b16 %v661
      %v1100 = vunpack.c.l.b16 %v662
      %v1101 = vunpack.c.h.b16 %v662
      %v1102 = vunpack.c.l.b16 %v663
      %v1103 = vunpack.c.h.b16 %v663
      %v1104 = vunpack.c.l.b16 %v664
      %v1105 = vunpack.c.h.b16 %v664
      %v1106 = vunpack.c.l.b16 %v665
      %v1107 = vunpack.c.h.b16 %v665
      %v1108 = vunpack.c.l.b16 %v666
      %v1109 = vunpack.c.h.b16 %v666
      %v1110 = vunpack.c.l.b16 %v667
      %v1111 = vunpack.c.h.b16 %v667
      %v1112 = vunpack.c.l.b16 %v668
      %v1113 = vunpack.c.h.b16 %v668
      %v1114 = vpack.c.b16 %v1036, %v1034
      %v1115 = vpack.c.b16 %v1037, %v1035
      %v1116 = vpack.c.b16 %v1040, %v1038
      %v1117 = vpack.c.b16 %v1041, %v1039
      %v1118 = vpack.c.b16 %v1044, %v1042
      %v1119 = vpack.c.b16 %v1045, %v1043
      %v1120 = vpack.c.b16 %v1048, %v1046
      %v1121 = vpack.c.b16 %v1049, %v1047
      %v1122 = vpack.c.b16 %v1052, %v1050
      %v1123 = vpack.c.b16 %v1053, %v1051
      %v1124 = vpack.c.b16 %v1056, %v1054
      %v1125 = vpack.c.b16 %v1057, %v1055
      %v1126 = vpack.c.b16 %v1060, %v1058
      %v1127 = vpack.c.b16 %v1061, %v1059
      %v1128 = vpack.c.b16 %v1064, %v1062
      %v1129 = vpack.c.b16 %v1065, %v1063
      %v1130 = vpack.c.b16 %v1068, %v1066
      %v1131 = vpack.c.b16 %v1069, %v1067
      %v1132 = vpack.c.b16 %v1072, %v1070
      %v1133 = vpack.c.b16 %v1073, %v1071
      %v1134 = vpack.c.b16 %v1076, %v1074
      %v1135 = vpack.c.b16 %v1077, %v1075
      %v1136 = vpack.c.b16 %v1080, %v1078
      %v1137 = vpack.c.b16 %v1081, %v1079
      %v1138 = vpack.c.b16 %v1084, %v1082
      %v1139 = vpack.c.b16 %v1085, %v1083
      %v1140 = vpack.c.b16 %v1088, %v1086
      %v1141 = vpack.c.b16 %v1089, %v1087
      %v1142 = vpack.c.b16 %v1092, %v1090
      %v1143 = vpack.c.b16 %v1093, %v1091
      %v1144 = vpack.c.b16 %v1096, %v1094
      %v1145 = vpack.c.b16 %v1097, %v1095
      %v1146 = vpack.c.b16 %v1100, %v1098
      %v1147 = vpack.c.b16 %v1101, %v1099
      %v1148 = vpack.c.b16 %v1104, %v1102
      %v1149 = vpack.c.b16 %v1105, %v1103
      %v1150 = vpack.c.b16 %v1108, %v1106
      %v1151 = vpack.c.b16 %v1109, %v1107
      %v1152 = vpack.c.b16 %v1112, %v1110
      %v1153 = vpack.c.b16 %v1113, %v1111
      %v1195 = vsel %vm587, %v628, 0
      %1197 = vmatprep.subr.bf16.mxu0 %v1115
      %1198 = vmatpush1.bf16.msra.mxu0 %v1114
      %1199 = vmatprep.subr.bf16.mxu0 %v1117
      %1200 = vmatpush1.bf16.msra.mxu0 %v1116
      %1201 = vmatprep.subr.bf16.mxu0 %v1119
      %1202 = vmatpush1.bf16.msra.mxu0 %v1118
      %1203 = vmatprep.subr.bf16.mxu0 %v1121
      %1204 = vmatpush1.bf16.msra.mxu0 %v1120
      %1205 = vmatprep.subr.bf16.mxu0 %v1123
      %1206 = vmatpush1.bf16.msra.mxu0 %v1122
      %1207 = vmatprep.subr.bf16.mxu0 %v1125
      %1208 = vmatpush1.bf16.msra.mxu0 %v1124
      %1209 = vmatprep.subr.bf16.mxu0 %v1127
      %1210 = vmatpush1.bf16.msra.mxu0 %v1126
      %1211 = vmatprep.subr.bf16.mxu0 %v1129
      %1212 = vmatpush1.bf16.msra.mxu0 %v1128
      %1213 = vmatprep.subr.bf16.mxu0 %v1131
      %1214 = vmatpush1.bf16.msra.mxu0 %v1130
      %1215 = vmatprep.subr.bf16.mxu0 %v1133
      %1216 = vmatpush1.bf16.msra.mxu0 %v1132
      %1217 = vmatprep.subr.bf16.mxu0 %v1135
      %1218 = vmatpush1.bf16.msra.mxu0 %v1134
      %1219 = vmatprep.subr.bf16.mxu0 %v1137
      %1220 = vmatpush1.bf16.msra.mxu0 %v1136
      %1221 = vmatprep.subr.bf16.mxu0 %v1139
      %1222 = vmatpush1.bf16.msra.mxu0 %v1138
      %1223 = vmatprep.subr.bf16.mxu0 %v1141
      %1224 = vmatpush1.bf16.msra.mxu0 %v1140
      %1225 = vmatprep.subr.bf16.mxu0 %v1143
      %1226 = vmatpush1.bf16.msra.mxu0 %v1142
      %1227 = vmatprep.subr.bf16.mxu0 %v1145
      %1228 = vmatpush1.bf16.msra.mxu0 %v1144
      %1229 = vmatprep.mubr.bf16.mxu0 %v627
      %1230 = vmatmul.mubr.bf16.gmra.mrb[0].mxu0 %v626
      %v1231 = vpop.f32.mrb[0].mxu0
      %v1232 = vadd.f32 %v988, %v1231
      %v1233 = vpop.f32.mrb[0].mxu0
      %v1234 = vadd.f32 %v990, %v1233
      %v1235 = vpop.f32.mrb[0].mxu0
      %v1236 = vpop.f32.mrb[0].mxu0
      %1237 = vdwg.mxu0
      %1238 = vmatprep.subr.bf16.mxu0 %v1147
      %1239 = vmatpush1.bf16.msra.mxu0 %v1146
      %1240 = vmatprep.subr.bf16.mxu0 %v1149
      %1241 = vmatpush1.bf16.msra.mxu0 %v1148
      %1242 = vmatprep.subr.bf16.mxu0 %v1151
      %1243 = vmatpush1.bf16.msra.mxu0 %v1150
      %1244 = vmatprep.subr.bf16.mxu0 %v1153
      %1245 = vmatpush1.bf16.msra.mxu0 %v1152
      %1246 = vmatprep.subr.bf16.mxu0 0
      %1247 = vmatpush1.bf16.msra.mxu0 0
      %1248 = vmatprep.subr.bf16.mxu0 0
      %1249 = vmatpush1.bf16.msra.mxu0 0
      %1250 = vmatprep.subr.bf16.mxu0 0
      %1251 = vmatpush1.bf16.msra.mxu0 0
      %1252 = vmatprep.subr.bf16.mxu0 0
      %1253 = vmatpush1.bf16.msra.mxu0 0
      %1254 = vmatprep.subr.bf16.mxu0 0
      %1255 = vmatpush1.bf16.msra.mxu0 0
      %1256 = vmatprep.subr.bf16.mxu0 0
      %1257 = vmatpush1.bf16.msra.mxu0 0
      %1258 = vmatprep.subr.bf16.mxu0 0
      %1259 = vmatpush1.bf16.msra.mxu0 0
      %1260 = vmatprep.subr.bf16.mxu0 0
      %1261 = vmatpush1.bf16.msra.mxu0 0
      %1262 = vmatprep.subr.bf16.mxu0 0
      %1263 = vmatpush1.bf16.msra.mxu0 0
      %1264 = vmatprep.subr.bf16.mxu0 0
      %1265 = vmatpush1.bf16.msra.mxu0 0
      %1266 = vmatprep.subr.bf16.mxu0 0
      %1267 = vmatpush1.bf16.msra.mxu0 0
      %1268 = vmatprep.subr.bf16.mxu0 0
      %1269 = vmatpush1.bf16.msra.mxu0 0
      %1270 = vmatprep.mubr.bf16.mxu0 0
      %1271 = vmatmul.mubr.bf16.gmra.mrb[0].mxu0 %v1195
      %v1272 = vpop.f32.mrb[0].mxu0
      %v1273 = vadd.f32 %v1232, %v1272
      %v1274 = vpop.f32.mrb[0].mxu0
      %v1275 = vadd.f32 %v1234, %v1274
      %v1276 = vpop.f32.mrb[0].mxu0
      %v1277 = vpop.f32.mrb[0].mxu0
      %1278 = vdwg.mxu0
      %v1279 = vrot.slane %v603, 1
      %v1280 = vor.u32 %v600, %v1279
      %v1281 = vrot.slane %v610, 1
      %v1282 = vor.u32 %v607, %v1281
      %v1283 = vrot.slane %v617, 1
      %v1284 = vor.u32 %v614, %v1283
      %vm1288 = vcmask 1043456
      %vm1289 = vsmask.f32 3328
      %vm1290 = vmand %vm1288, %vm1289
      %v1291 = vsel %vm1290, %v1280, 0
      %v1292 = vsel %vm1290, %v1282, 0
      %v1293 = vsel %vm1290, %v1284, 0
      %s1294 = scalar_lea.vmem %s3, 640
      %v1295 = vld [vmem:[%s1294] sm:$0xff]
      %v1296 = vld [vmem:[%s1294 + $0x8] sm:$0xff]
      %v1297 = vld [vmem:[%s1294 + $0x10] sm:$0xff]
      %v1298 = vld [vmem:[%s1294 + $0x18] sm:$0xff]
      %v1299 = vld [vmem:[%s1294 + $0x20] sm:$0xff]
      %v1300 = vld [vmem:[%s1294 + $0x28] sm:$0xff]
      %v1301 = vld [vmem:[%s1294 + $0x30] sm:$0xff]
      %v1302 = vld [vmem:[%s1294 + $0x38] sm:$0xff]
      %v1303 = vld [vmem:[%s1294 + $0x40] sm:$0xff]
      %v1304 = vld [vmem:[%s1294 + $0x48] sm:$0xff]
      %v1305 = vld [vmem:[%s1294 + $0x50] sm:$0xff]
      %v1306 = vld [vmem:[%s1294 + $0x58] sm:$0xff]
      %v1307 = vld [vmem:[%s1294 + $0x60] sm:$0xff]
      %v1308 = vld [vmem:[%s1294 + $0x68] sm:$0xff]
      %v1309 = vld [vmem:[%s1294 + $0x70] sm:$0xff]
      %v1310 = vld [vmem:[%s1294 + $0x78] sm:$0xff]
      %v1311 = vld [vmem:[%s1294 + $0x80] sm:$0xff]
      %v1312 = vld [vmem:[%s1294 + $0x88] sm:$0xff]
      %v1313 = vld [vmem:[%s1294 + $0x90] sm:$0xff]
      %v1314 = vld [vmem:[%s1294 + $0x98] sm:$0xff]
      %v1315 = vld [vmem:[%s1294 + $0xa0] sm:$0xff]
      %v1316 = vld [vmem:[%s1294 + $0xa8] sm:$0xff]
      %v1317 = vld [vmem:[%s1294 + $0xb0] sm:$0xff]
      %v1318 = vld [vmem:[%s1294 + $0xb8] sm:$0xff]
      %v1319 = vld [vmem:[%s1294 + $0xc0] sm:$0xff]
      %v1320 = vld [vmem:[%s1294 + $0xc8] sm:$0xff]
      %v1321 = vld [vmem:[%s1294 + $0xd0] sm:$0xff]
      %v1322 = vld [vmem:[%s1294 + $0xd8] sm:$0xff]
      %v1323 = vld [vmem:[%s1294 + $0xe0] sm:$0xff]
      %v1324 = vld [vmem:[%s1294 + $0xe8] sm:$0xff]
      %v1325 = vld [vmem:[%s1294 + $0xf0] sm:$0xff]
      %v1326 = vld [vmem:[%s1294 + $0xf8] sm:$0xff]
      %v1327 = vld [vmem:[%s1294 + $0x100] sm:$0xff]
      %v1328 = vld [vmem:[%s1294 + $0x108] sm:$0xff]
      %v1329 = vld [vmem:[%s1294 + $0x110] sm:$0xff]
      %v1330 = vld [vmem:[%s1294 + $0x118] sm:$0xff]
      %v1331 = vld [vmem:[%s1294 + $0x120] sm:$0xff]
      %v1332 = vld [vmem:[%s1294 + $0x128] sm:$0xff]
      %v1333 = vld [vmem:[%s1294 + $0x130] sm:$0xff]
      %v1334 = vld [vmem:[%s1294 + $0x138] sm:$0xff]
      %v1375 = vunpack.c.l.b16 %v1295
      %v1376 = vunpack.c.h.b16 %v1295
      %v1377 = vunpack.c.l.b16 %v1296
      %v1378 = vunpack.c.h.b16 %v1296
      %v1379 = vunpack.c.l.b16 %v1297
      %v1380 = vunpack.c.h.b16 %v1297
      %v1381 = vunpack.c.l.b16 %v1298
      %v1382 = vunpack.c.h.b16 %v1298
      %v1383 = vunpack.c.l.b16 %v1299
      %v1384 = vunpack.c.h.b16 %v1299
      %v1385 = vunpack.c.l.b16 %v1300
      %v1386 = vunpack.c.h.b16 %v1300
      %v1387 = vunpack.c.l.b16 %v1301
      %v1388 = vunpack.c.h.b16 %v1301
      %v1389 = vunpack.c.l.b16 %v1302
      %v1390 = vunpack.c.h.b16 %v1302
      %v1391 = vunpack.c.l.b16 %v1303
      %v1392 = vunpack.c.h.b16 %v1303
      %v1393 = vunpack.c.l.b16 %v1304
      %v1394 = vunpack.c.h.b16 %v1304
      %v1395 = vunpack.c.l.b16 %v1305
      %v1396 = vunpack.c.h.b16 %v1305
      %v1397 = vunpack.c.l.b16 %v1306
      %v1398 = vunpack.c.h.b16 %v1306
      %v1399 = vunpack.c.l.b16 %v1307
      %v1400 = vunpack.c.h.b16 %v1307
      %v1401 = vunpack.c.l.b16 %v1308
      %v1402 = vunpack.c.h.b16 %v1308
      %v1403 = vunpack.c.l.b16 %v1309
      %v1404 = vunpack.c.h.b16 %v1309
      %v1405 = vunpack.c.l.b16 %v1310
      %v1406 = vunpack.c.h.b16 %v1310
      %v1407 = vunpack.c.l.b16 %v1311
      %v1408 = vunpack.c.h.b16 %v1311
      %v1409 = vunpack.c.l.b16 %v1312
      %v1410 = vunpack.c.h.b16 %v1312
      %v1411 = vunpack.c.l.b16 %v1313
      %v1412 = vunpack.c.h.b16 %v1313
      %v1413 = vunpack.c.l.b16 %v1314
      %v1414 = vunpack.c.h.b16 %v1314
      %v1415 = vunpack.c.l.b16 %v1315
      %v1416 = vunpack.c.h.b16 %v1315
      %v1417 = vunpack.c.l.b16 %v1316
      %v1418 = vunpack.c.h.b16 %v1316
      %v1419 = vunpack.c.l.b16 %v1317
      %v1420 = vunpack.c.h.b16 %v1317
      %v1421 = vunpack.c.l.b16 %v1318
      %v1422 = vunpack.c.h.b16 %v1318
      %v1423 = vunpack.c.l.b16 %v1319
      %v1424 = vunpack.c.h.b16 %v1319
      %v1425 = vunpack.c.l.b16 %v1320
      %v1426 = vunpack.c.h.b16 %v1320
      %v1427 = vunpack.c.l.b16 %v1321
      %v1428 = vunpack.c.h.b16 %v1321
      %v1429 = vunpack.c.l.b16 %v1322
      %v1430 = vunpack.c.h.b16 %v1322
      %v1431 = vunpack.c.l.b16 %v1323
      %v1432 = vunpack.c.h.b16 %v1323
      %v1433 = vunpack.c.l.b16 %v1324
      %v1434 = vunpack.c.h.b16 %v1324
      %v1435 = vunpack.c.l.b16 %v1325
      %v1436 = vunpack.c.h.b16 %v1325
      %v1437 = vunpack.c.l.b16 %v1326
      %v1438 = vunpack.c.h.b16 %v1326
      %v1439 = vunpack.c.l.b16 %v1327
      %v1440 = vunpack.c.h.b16 %v1327
      %v1441 = vunpack.c.l.b16 %v1328
      %v1442 = vunpack.c.h.b16 %v1328
      %v1443 = vunpack.c.l.b16 %v1329
      %v1444 = vunpack.c.h.b16 %v1329
      %v1445 = vunpack.c.l.b16 %v1330
      %v1446 = vunpack.c.h.b16 %v1330
      %v1447 = vunpack.c.l.b16 %v1331
      %v1448 = vunpack.c.h.b16 %v1331
      %v1449 = vunpack.c.l.b16 %v1332
      %v1450 = vunpack.c.h.b16 %v1332
      %v1451 = vunpack.c.l.b16 %v1333
      %v1452 = vunpack.c.h.b16 %v1333
      %v1453 = vunpack.c.l.b16 %v1334
      %v1454 = vunpack.c.h.b16 %v1334
      %v1455 = vpack.c.b16 %v1377, %v1375
      %v1456 = vpack.c.b16 %v1378, %v1376
      %v1457 = vpack.c.b16 %v1381, %v1379
      %v1458 = vpack.c.b16 %v1382, %v1380
      %v1459 = vpack.c.b16 %v1385, %v1383
      %v1460 = vpack.c.b16 %v1386, %v1384
      %v1461 = vpack.c.b16 %v1389, %v1387
      %v1462 = vpack.c.b16 %v1390, %v1388
      %v1463 = vpack.c.b16 %v1393, %v1391
      %v1464 = vpack.c.b16 %v1394, %v1392
      %v1465 = vpack.c.b16 %v1397, %v1395
      %v1466 = vpack.c.b16 %v1398, %v1396
      %v1467 = vpack.c.b16 %v1401, %v1399
      %v1468 = vpack.c.b16 %v1402, %v1400
      %v1469 = vpack.c.b16 %v1405, %v1403
      %v1470 = vpack.c.b16 %v1406, %v1404
      %v1471 = vpack.c.b16 %v1409, %v1407
      %v1472 = vpack.c.b16 %v1410, %v1408
      %v1473 = vpack.c.b16 %v1413, %v1411
      %v1474 = vpack.c.b16 %v1414, %v1412
      %v1475 = vpack.c.b16 %v1417, %v1415
      %v1476 = vpack.c.b16 %v1418, %v1416
      %v1477 = vpack.c.b16 %v1421, %v1419
      %v1478 = vpack.c.b16 %v1422, %v1420
      %v1479 = vpack.c.b16 %v1425, %v1423
      %v1480 = vpack.c.b16 %v1426, %v1424
      %v1481 = vpack.c.b16 %v1429, %v1427
      %v1482 = vpack.c.b16 %v1430, %v1428
      %v1483 = vpack.c.b16 %v1433, %v1431
      %v1484 = vpack.c.b16 %v1434, %v1432
      %v1485 = vpack.c.b16 %v1437, %v1435
      %v1486 = vpack.c.b16 %v1438, %v1436
      %v1487 = vpack.c.b16 %v1441, %v1439
      %v1488 = vpack.c.b16 %v1442, %v1440
      %v1489 = vpack.c.b16 %v1445, %v1443
      %v1490 = vpack.c.b16 %v1446, %v1444
      %v1491 = vpack.c.b16 %v1449, %v1447
      %v1492 = vpack.c.b16 %v1450, %v1448
      %v1493 = vpack.c.b16 %v1453, %v1451
      %v1494 = vpack.c.b16 %v1454, %v1452
      %v1536 = vsel %vm587, %v1293, 0
      %1538 = vmatprep.subr.bf16.mxu0 %v1456
      %1539 = vmatpush1.bf16.msra.mxu0 %v1455
      %1540 = vmatprep.subr.bf16.mxu0 %v1458
      %1541 = vmatpush1.bf16.msra.mxu0 %v1457
      %1542 = vmatprep.subr.bf16.mxu0 %v1460
      %1543 = vmatpush1.bf16.msra.mxu0 %v1459
      %1544 = vmatprep.subr.bf16.mxu0 %v1462
      %1545 = vmatpush1.bf16.msra.mxu0 %v1461
      %1546 = vmatprep.subr.bf16.mxu0 %v1464
      %1547 = vmatpush1.bf16.msra.mxu0 %v1463
      %1548 = vmatprep.subr.bf16.mxu0 %v1466
      %1549 = vmatpush1.bf16.msra.mxu0 %v1465
      %1550 = vmatprep.subr.bf16.mxu0 %v1468
      %1551 = vmatpush1.bf16.msra.mxu0 %v1467
      %1552 = vmatprep.subr.bf16.mxu0 %v1470
      %1553 = vmatpush1.bf16.msra.mxu0 %v1469
      %1554 = vmatprep.subr.bf16.mxu0 %v1472
      %1555 = vmatpush1.bf16.msra.mxu0 %v1471
      %1556 = vmatprep.subr.bf16.mxu0 %v1474
      %1557 = vmatpush1.bf16.msra.mxu0 %v1473
      %1558 = vmatprep.subr.bf16.mxu0 %v1476
      %1559 = vmatpush1.bf16.msra.mxu0 %v1475
      %1560 = vmatprep.subr.bf16.mxu0 %v1478
      %1561 = vmatpush1.bf16.msra.mxu0 %v1477
      %1562 = vmatprep.subr.bf16.mxu0 %v1480
      %1563 = vmatpush1.bf16.msra.mxu0 %v1479
      %1564 = vmatprep.subr.bf16.mxu0 %v1482
      %1565 = vmatpush1.bf16.msra.mxu0 %v1481
      %1566 = vmatprep.subr.bf16.mxu0 %v1484
      %1567 = vmatpush1.bf16.msra.mxu0 %v1483
      %1568 = vmatprep.subr.bf16.mxu0 %v1486
      %1569 = vmatpush1.bf16.msra.mxu0 %v1485
      %1570 = vmatprep.mubr.bf16.mxu0 %v1292
      %1571 = vmatmul.mubr.bf16.gmra.mrb[0].mxu0 %v1291
      %v1572 = vpop.f32.mrb[0].mxu0
      %v1573 = vadd.f32 0.0, %v1572
      %v1574 = vpop.f32.mrb[0].mxu0
      %v1575 = vadd.f32 0.0, %v1574
      %v1576 = vpop.f32.mrb[0].mxu0
      %v1577 = vpop.f32.mrb[0].mxu0
      %1578 = vdwg.mxu0
      %1579 = vmatprep.subr.bf16.mxu0 %v1488
      %1580 = vmatpush1.bf16.msra.mxu0 %v1487
      %1581 = vmatprep.subr.bf16.mxu0 %v1490
      %1582 = vmatpush1.bf16.msra.mxu0 %v1489
      %1583 = vmatprep.subr.bf16.mxu0 %v1492
      %1584 = vmatpush1.bf16.msra.mxu0 %v1491
      %1585 = vmatprep.subr.bf16.mxu0 %v1494
      %1586 = vmatpush1.bf16.msra.mxu0 %v1493
      %1587 = vmatprep.subr.bf16.mxu0 0
      %1588 = vmatpush1.bf16.msra.mxu0 0
      %1589 = vmatprep.subr.bf16.mxu0 0
      %1590 = vmatpush1.bf16.msra.mxu0 0
      %1591 = vmatprep.subr.bf16.mxu0 0
      %1592 = vmatpush1.bf16.msra.mxu0 0
      %1593 = vmatprep.subr.bf16.mxu0 0
      %1594 = vmatpush1.bf16.msra.mxu0 0
      %1595 = vmatprep.subr.bf16.mxu0 0
      %1596 = vmatpush1.bf16.msra.mxu0 0
      %1597 = vmatprep.subr.bf16.mxu0 0
      %1598 = vmatpush1.bf16.msra.mxu0 0
      %1599 = vmatprep.subr.bf16.mxu0 0
      %1600 = vmatpush1.bf16.msra.mxu0 0
      %1601 = vmatprep.subr.bf16.mxu0 0
      %1602 = vmatpush1.bf16.msra.mxu0 0
      %1603 = vmatprep.subr.bf16.mxu0 0
      %1604 = vmatpush1.bf16.msra.mxu0 0
      %1605 = vmatprep.subr.bf16.mxu0 0
      %1606 = vmatpush1.bf16.msra.mxu0 0
      %1607 = vmatprep.subr.bf16.mxu0 0
      %1608 = vmatpush1.bf16.msra.mxu0 0
      %1609 = vmatprep.subr.bf16.mxu0 0
      %1610 = vmatpush1.bf16.msra.mxu0 0
      %1611 = vmatprep.mubr.bf16.mxu0 0
      %1612 = vmatmul.mubr.bf16.gmra.mrb[0].mxu0 %v1536
      %v1613 = vpop.f32.mrb[0].mxu0
      %v1614 = vadd.f32 %v1573, %v1613
      %v1615 = vpop.f32.mrb[0].mxu0
      %v1616 = vadd.f32 %v1575, %v1615
      %v1617 = vpop.f32.mrb[0].mxu0
      %v1618 = vpop.f32.mrb[0].mxu0
      %1619 = vdwg.mxu0
      %v1620 = vadd.f32 %v1273, %v1614
      %v1621 = vadd.f32 %v1275, %v1616
      %v1622 = vld [vmem:[%s4] sm:$0x3]
      %v1624 = vlaneseq
      %v1625 = vshrl.u32 %v1624, 7
      %v1626 = vsub.s32 0, %v1625
      %v1627 = vrot.slane %v1622, %v1626
      %v1628 = vlaneseq
      %v1629 = vshrl.u32 %v1628, 7
      %v1630 = vsub.s32 1, %v1629
      %v1631 = vrot.slane %v1622, %v1630
      %v1634 = vadd.f32 %v1620, %v1627
      %v1635 = vadd.f32 %v1621, %v1631
      %v1636 = vmax.f32 %v1634, 0.0
      %v1637 = vmax.f32 %v1635, 0.0
      %v1638 = vpack.c.bf16 %v1636, %v1636
      %v1639 = vpack.c.bf16 %v1637, %v1637
      %v1640 = vld [vmem:[%s5] sm:$0xff]
      %v1641 = vld [vmem:[%s5 + $0x8] sm:$0xff]
      %v1642 = vld [vmem:[%s5 + $0x10] sm:$0xff]
      %v1643 = vld [vmem:[%s5 + $0x18] sm:$0xff]
      %v1644 = vld [vmem:[%s5 + $0x20] sm:$0xff]
      %v1645 = vld [vmem:[%s5 + $0x28] sm:$0xff]
      %v1646 = vld [vmem:[%s5 + $0x30] sm:$0xff]
      %v1647 = vld [vmem:[%s5 + $0x38] sm:$0xff]
      %v1648 = vld [vmem:[%s5 + $0x40] sm:$0xff]
      %v1649 = vld [vmem:[%s5 + $0x48] sm:$0xff]
      %v1650 = vld [vmem:[%s5 + $0x50] sm:$0xff]
      %v1651 = vld [vmem:[%s5 + $0x58] sm:$0xff]
      %v1652 = vld [vmem:[%s5 + $0x60] sm:$0xff]
      %v1653 = vld [vmem:[%s5 + $0x68] sm:$0xff]
      %v1654 = vld [vmem:[%s5 + $0x70] sm:$0xff]
      %v1655 = vld [vmem:[%s5 + $0x78] sm:$0xff]
      %v1656 = vld [vmem:[%s5 + $0x80] sm:$0xff]
      %v1657 = vld [vmem:[%s5 + $0x88] sm:$0xff]
      %v1658 = vld [vmem:[%s5 + $0x90] sm:$0xff]
      %v1659 = vld [vmem:[%s5 + $0x98] sm:$0xff]
      %v1660 = vld [vmem:[%s5 + $0xa0] sm:$0xff]
      %v1661 = vld [vmem:[%s5 + $0xa8] sm:$0xff]
      %v1662 = vld [vmem:[%s5 + $0xb0] sm:$0xff]
      %v1663 = vld [vmem:[%s5 + $0xb8] sm:$0xff]
      %v1664 = vld [vmem:[%s5 + $0xc0] sm:$0xff]
      %v1665 = vld [vmem:[%s5 + $0xc8] sm:$0xff]
      %v1666 = vld [vmem:[%s5 + $0xd0] sm:$0xff]
      %v1667 = vld [vmem:[%s5 + $0xd8] sm:$0xff]
      %v1668 = vld [vmem:[%s5 + $0xe0] sm:$0xff]
      %v1669 = vld [vmem:[%s5 + $0xe8] sm:$0xff]
      %v1670 = vld [vmem:[%s5 + $0xf0] sm:$0xff]
      %v1671 = vld [vmem:[%s5 + $0xf8] sm:$0xff]
      %v1672 = vld [vmem:[%s5 + $0x100] sm:$0xff]
      %v1673 = vld [vmem:[%s5 + $0x108] sm:$0xff]
      %v1674 = vld [vmem:[%s5 + $0x110] sm:$0xff]
      %v1675 = vld [vmem:[%s5 + $0x118] sm:$0xff]
      %v1676 = vld [vmem:[%s5 + $0x120] sm:$0xff]
      %v1677 = vld [vmem:[%s5 + $0x128] sm:$0xff]
      %v1678 = vld [vmem:[%s5 + $0x130] sm:$0xff]
      %v1679 = vld [vmem:[%s5 + $0x138] sm:$0xff]
      %v1680 = vld [vmem:[%s6] sm:$0xf]
      %v1682 = vlaneseq
      %v1683 = vshrl.u32 %v1682, 7
      %v1684 = vsub.s32 0, %v1683
      %v1685 = vrot.slane %v1680, %v1684
      %v1686 = vlaneseq
      %v1687 = vshrl.u32 %v1686, 7
      %v1688 = vsub.s32 1, %v1687
      %v1689 = vrot.slane %v1680, %v1688
      %v1690 = vlaneseq
      %v1691 = vshrl.u32 %v1690, 7
      %v1692 = vsub.s32 2, %v1691
      %v1693 = vrot.slane %v1680, %v1692
      %v1694 = vlaneseq
      %v1695 = vshrl.u32 %v1694, 7
      %v1696 = vsub.s32 3, %v1695
      %v1697 = vrot.slane %v1680, %v1696
      %v1742 = vunpack.c.l.b16 %v1640
      %v1743 = vunpack.c.h.b16 %v1640
      %v1744 = vunpack.c.l.b16 %v1641
      %v1745 = vunpack.c.h.b16 %v1641
      %v1746 = vunpack.c.l.b16 %v1642
      %v1747 = vunpack.c.h.b16 %v1642
      %v1748 = vunpack.c.l.b16 %v1643
      %v1749 = vunpack.c.h.b16 %v1643
      %v1750 = vunpack.c.l.b16 %v1644
      %v1751 = vunpack.c.h.b16 %v1644
      %v1752 = vunpack.c.l.b16 %v1645
      %v1753 = vunpack.c.h.b16 %v1645
      %v1754 = vunpack.c.l.b16 %v1646
      %v1755 = vunpack.c.h.b16 %v1646
      %v1756 = vunpack.c.l.b16 %v1647
      %v1757 = vunpack.c.h.b16 %v1647
      %v1758 = vunpack.c.l.b16 %v1648
      %v1759 = vunpack.c.h.b16 %v1648
      %v1760 = vunpack.c.l.b16 %v1649
      %v1761 = vunpack.c.h.b16 %v1649
      %v1762 = vunpack.c.l.b16 %v1650
      %v1763 = vunpack.c.h.b16 %v1650
      %v1764 = vunpack.c.l.b16 %v1651
      %v1765 = vunpack.c.h.b16 %v1651
      %v1766 = vunpack.c.l.b16 %v1652
      %v1767 = vunpack.c.h.b16 %v1652
      %v1768 = vunpack.c.l.b16 %v1653
      %v1769 = vunpack.c.h.b16 %v1653
      %v1770 = vunpack.c.l.b16 %v1654
      %v1771 = vunpack.c.h.b16 %v1654
      %v1772 = vunpack.c.l.b16 %v1655
      %v1773 = vunpack.c.h.b16 %v1655
      %v1774 = vunpack.c.l.b16 %v1656
      %v1775 = vunpack.c.h.b16 %v1656
      %v1776 = vunpack.c.l.b16 %v1657
      %v1777 = vunpack.c.h.b16 %v1657
      %v1778 = vunpack.c.l.b16 %v1658
      %v1779 = vunpack.c.h.b16 %v1658
      %v1780 = vunpack.c.l.b16 %v1659
      %v1781 = vunpack.c.h.b16 %v1659
      %v1782 = vunpack.c.l.b16 %v1660
      %v1783 = vunpack.c.h.b16 %v1660
      %v1784 = vunpack.c.l.b16 %v1661
      %v1785 = vunpack.c.h.b16 %v1661
      %v1786 = vunpack.c.l.b16 %v1662
      %v1787 = vunpack.c.h.b16 %v1662
      %v1788 = vunpack.c.l.b16 %v1663
      %v1789 = vunpack.c.h.b16 %v1663
      %v1790 = vunpack.c.l.b16 %v1664
      %v1791 = vunpack.c.h.b16 %v1664
      %v1792 = vunpack.c.l.b16 %v1665
      %v1793 = vunpack.c.h.b16 %v1665
      %v1794 = vunpack.c.l.b16 %v1666
      %v1795 = vunpack.c.h.b16 %v1666
      %v1796 = vunpack.c.l.b16 %v1667
      %v1797 = vunpack.c.h.b16 %v1667
      %v1798 = vunpack.c.l.b16 %v1668
      %v1799 = vunpack.c.h.b16 %v1668
      %v1800 = vunpack.c.l.b16 %v1669
      %v1801 = vunpack.c.h.b16 %v1669
      %v1802 = vunpack.c.l.b16 %v1670
      %v1803 = vunpack.c.h.b16 %v1670
      %v1804 = vunpack.c.l.b16 %v1671
      %v1805 = vunpack.c.h.b16 %v1671
      %v1806 = vunpack.c.l.b16 %v1672
      %v1807 = vunpack.c.h.b16 %v1672
      %v1808 = vunpack.c.l.b16 %v1673
      %v1809 = vunpack.c.h.b16 %v1673
      %v1810 = vunpack.c.l.b16 %v1674
      %v1811 = vunpack.c.h.b16 %v1674
      %v1812 = vunpack.c.l.b16 %v1675
      %v1813 = vunpack.c.h.b16 %v1675
      %v1814 = vunpack.c.l.b16 %v1676
      %v1815 = vunpack.c.h.b16 %v1676
      %v1816 = vunpack.c.l.b16 %v1677
      %v1817 = vunpack.c.h.b16 %v1677
      %v1818 = vunpack.c.l.b16 %v1678
      %v1819 = vunpack.c.h.b16 %v1678
      %v1820 = vunpack.c.l.b16 %v1679
      %v1821 = vunpack.c.h.b16 %v1679
      %v1822 = vpack.c.b16 %v1746, %v1742
      %v1823 = vpack.c.b16 %v1747, %v1743
      %v1824 = vpack.c.b16 %v1748, %v1744
      %v1825 = vpack.c.b16 %v1749, %v1745
      %v1826 = vpack.c.b16 %v1754, %v1750
      %v1827 = vpack.c.b16 %v1755, %v1751
      %v1828 = vpack.c.b16 %v1756, %v1752
      %v1829 = vpack.c.b16 %v1757, %v1753
      %v1830 = vpack.c.b16 %v1762, %v1758
      %v1831 = vpack.c.b16 %v1763, %v1759
      %v1832 = vpack.c.b16 %v1764, %v1760
      %v1833 = vpack.c.b16 %v1765, %v1761
      %v1834 = vpack.c.b16 %v1770, %v1766
      %v1835 = vpack.c.b16 %v1771, %v1767
      %v1836 = vpack.c.b16 %v1772, %v1768
      %v1837 = vpack.c.b16 %v1773, %v1769
      %v1838 = vpack.c.b16 %v1778, %v1774
      %v1839 = vpack.c.b16 %v1779, %v1775
      %v1840 = vpack.c.b16 %v1780, %v1776
      %v1841 = vpack.c.b16 %v1781, %v1777
      %v1842 = vpack.c.b16 %v1786, %v1782
      %v1843 = vpack.c.b16 %v1787, %v1783
      %v1844 = vpack.c.b16 %v1788, %v1784
      %v1845 = vpack.c.b16 %v1789, %v1785
      %v1846 = vpack.c.b16 %v1794, %v1790
      %v1847 = vpack.c.b16 %v1795, %v1791
      %v1848 = vpack.c.b16 %v1796, %v1792
      %v1849 = vpack.c.b16 %v1797, %v1793
      %v1850 = vpack.c.b16 %v1802, %v1798
      %v1851 = vpack.c.b16 %v1803, %v1799
      %v1852 = vpack.c.b16 %v1804, %v1800
      %v1853 = vpack.c.b16 %v1805, %v1801
      %v1854 = vpack.c.b16 %v1810, %v1806
      %v1855 = vpack.c.b16 %v1811, %v1807
      %v1856 = vpack.c.b16 %v1812, %v1808
      %v1857 = vpack.c.b16 %v1813, %v1809
      %v1858 = vpack.c.b16 %v1818, %v1814
      %v1859 = vpack.c.b16 %v1819, %v1815
      %v1860 = vpack.c.b16 %v1820, %v1816
      %v1861 = vpack.c.b16 %v1821, %v1817
      %vm1902 = vcmask 261120
      %v1904 = vsel %vm1902, %v1639, 0
      %1906 = vmatprep.subr.bf16.mxu0 %v1823
      %1907 = vmatpush1.bf16.msra.mxu0 %v1822
      %1908 = vmatprep.subr.bf16.mxu0 %v1827
      %1909 = vmatpush1.bf16.msra.mxu0 %v1826
      %1910 = vmatprep.subr.bf16.mxu0 %v1831
      %1911 = vmatpush1.bf16.msra.mxu0 %v1830
      %1912 = vmatprep.subr.bf16.mxu0 %v1835
      %1913 = vmatpush1.bf16.msra.mxu0 %v1834
      %1914 = vmatprep.subr.bf16.mxu0 %v1839
      %1915 = vmatpush1.bf16.msra.mxu0 %v1838
      %1916 = vmatprep.subr.bf16.mxu0 %v1843
      %1917 = vmatpush1.bf16.msra.mxu0 %v1842
      %1918 = vmatprep.subr.bf16.mxu0 %v1847
      %1919 = vmatpush1.bf16.msra.mxu0 %v1846
      %1920 = vmatprep.subr.bf16.mxu0 %v1851
      %1921 = vmatpush1.bf16.msra.mxu0 %v1850
      %1922 = vmatprep.subr.bf16.mxu0 %v1855
      %1923 = vmatpush1.bf16.msra.mxu0 %v1854
      %1924 = vmatprep.subr.bf16.mxu0 %v1859
      %1925 = vmatpush1.bf16.msra.mxu0 %v1858
      %1926 = vmatprep.subr.bf16.mxu0 0
      %1927 = vmatpush1.bf16.msra.mxu0 0
      %1928 = vmatprep.subr.bf16.mxu0 0
      %1929 = vmatpush1.bf16.msra.mxu0 0
      %1930 = vmatprep.subr.bf16.mxu0 0
      %1931 = vmatpush1.bf16.msra.mxu0 0
      %1932 = vmatprep.subr.bf16.mxu0 0
      %1933 = vmatpush1.bf16.msra.mxu0 0
      %1934 = vmatprep.subr.bf16.mxu0 0
      %1935 = vmatpush1.bf16.msra.mxu0 0
      %1936 = vmatprep.subr.bf16.mxu0 0
      %1937 = vmatpush1.bf16.msra.mxu0 0
      %1938 = vmatprep.mubr.bf16.mxu0 %v1904
      %1939 = vmatmul.mubr.bf16.gmra.mrb[0].mxu0 %v1638
      %v1940 = vpop.f32.mrb[0].mxu0
      %v1941 = vadd.f32 %v1685, %v1940
      %v1942 = vpop.f32.mrb[0].mxu0
      %v1943 = vadd.f32 %v1689, %v1942
      %v1944 = vpop.f32.mrb[0].mxu0
      %v1945 = vpop.f32.mrb[0].mxu0
      %1946 = vdwg.mxu0
      %1947 = vmatprep.subr.bf16.mxu0 %v1825
      %1948 = vmatpush1.bf16.msra.mxu0 %v1824
      %1949 = vmatprep.subr.bf16.mxu0 %v1829
      %1950 = vmatpush1.bf16.msra.mxu0 %v1828
      %1951 = vmatprep.subr.bf16.mxu0 %v1833
      %1952 = vmatpush1.bf16.msra.mxu0 %v1832
      %1953 = vmatprep.subr.bf16.mxu0 %v1837
      %1954 = vmatpush1.bf16.msra.mxu0 %v1836
      %1955 = vmatprep.subr.bf16.mxu0 %v1841
      %1956 = vmatpush1.bf16.msra.mxu0 %v1840
      %1957 = vmatprep.subr.bf16.mxu0 %v1845
      %1958 = vmatpush1.bf16.msra.mxu0 %v1844
      %1959 = vmatprep.subr.bf16.mxu0 %v1849
      %1960 = vmatpush1.bf16.msra.mxu0 %v1848
      %1961 = vmatprep.subr.bf16.mxu0 %v1853
      %1962 = vmatpush1.bf16.msra.mxu0 %v1852
      %1963 = vmatprep.subr.bf16.mxu0 %v1857
      %1964 = vmatpush1.bf16.msra.mxu0 %v1856
      %1965 = vmatprep.subr.bf16.mxu0 %v1861
      %1966 = vmatpush1.bf16.msra.mxu0 %v1860
      %1967 = vmatprep.subr.bf16.mxu0 0
      %1968 = vmatpush1.bf16.msra.mxu0 0
      %1969 = vmatprep.subr.bf16.mxu0 0
      %1970 = vmatpush1.bf16.msra.mxu0 0
      %1971 = vmatprep.subr.bf16.mxu0 0
      %1972 = vmatpush1.bf16.msra.mxu0 0
      %1973 = vmatprep.subr.bf16.mxu0 0
      %1974 = vmatpush1.bf16.msra.mxu0 0
      %1975 = vmatprep.subr.bf16.mxu0 0
      %1976 = vmatpush1.bf16.msra.mxu0 0
      %1977 = vmatprep.subr.bf16.mxu0 0
      %1978 = vmatpush1.bf16.msra.mxu0 0
      %1979 = vmatprep.mubr.bf16.mxu0 %v1904
      %1980 = vmatmul.mubr.bf16.gmra.mrb[0].mxu0 %v1638
      %v1981 = vpop.f32.mrb[0].mxu0
      %v1982 = vadd.f32 %v1693, %v1981
      %v1983 = vpop.f32.mrb[0].mxu0
      %v1984 = vadd.f32 %v1697, %v1983
      %v1985 = vpop.f32.mrb[0].mxu0
      %v1986 = vpop.f32.mrb[0].mxu0
      %1987 = vdwg.mxu0
      %v1988 = vmul.f32 %v1982, 0.5
      %v1989 = vmul.f32 %v1984, 0.5
      %v1990 = vtanh.pop %v1988
      %v1991 = vtanh.pop %v1989
      %v1992 = vadd.f32 %v1990, 1.0
      %v1993 = vadd.f32 %v1991, 1.0
      %v1994 = vmul.f32 %v1992, 0.5
      %v1995 = vmul.f32 %v1993, 0.5
      %v1996 = vmul.f32 %v1941, %v1994
      %v1997 = vmul.f32 %v1943, %v1995
      %v1998 = vpack.c.bf16 %v1996, %v1996
      %v1999 = vpack.c.bf16 %v1997, %v1997
      %v2002 = vunpack.c.l.b16 %v1998
      %v2003 = vunpack.c.l.b16 %v1999
      %v2004 = vpack.c.b16 %v2003, %v2002
      %2006 = vst [vmem:[%s309] sm:$0xff] %v2004
      %v2007 = vadd.f32 %v1996, %v1997
      %2008 = vadd.xlane.f32.xlu0 %v2007
      %v2009 = vpop.xlane.xlu0 %2008
      %v2010 = vmul.f32 %v1996, %v1996
      %v2011 = vmul.f32 %v1997, %v1997
      %v2012 = vadd.f32 %v2010, %v2011
      %2013 = vadd.xlane.f32.xlu0 %v2012
      %v2014 = vpop.xlane.xlu0 %2013
      %vm2015 = vcmask 7168
      %v2016 = vsel %vm2015, %v2009, %v2014
      %vm2017 = vcmask 15360
      %2018 = vst.msk [vmem:[%s313] sm:$0xff] %vm2017, %v2016
      %p2019 = scmp.lt.s32.totalorder %s20, 1
      %s2020 = scalar_select %p2019, %s20, 1
      %s2021 = smul.addr %s2020, 2
      %s2022 = smul.addr %s2021, 4
      %s2023 = scalar_lea.vmem %s7, %s2022
      %p2024 = scmp.lt.s32.totalorder %s20, 1
      %s2025 = scalar_select %p2024, %s20, 1
      %s2026 = smul.addr %s2025, 8
      %s2027 = scalar_lea.vmem %s8, %s2026
      // Predicated region
      $region49: #{_lambda_.2} parent=47 // pred_check
        %p2028 = pneg %p190
      $region50: #{_lambda_.2} parent=47 // pred_check_branch
        %2030 = sbr.rel (%p2028) target = $region52
      $region51: #{_lambda_.2} parent=47 // pred_region
        _
      $region52: #{_lambda_.2} parent=47 // pred_fallthru
        _
      // Predicated region
      $region53: #{_lambda_.2} parent=47 // pred_check
        %p2031 = pneg %p216
      $region54: #{_lambda_.2} parent=47 // pred_check_branch
        %2033 = sbr.rel (%p2031) target = $region56
      $region55: #{_lambda_.2} parent=47 // pred_region
        _
      $region56: #{_lambda_.2} parent=47 // pred_fallthru
        _
    $region48: #{_lambda_.2} parent=5 // pred_fallthru
      _
    %p2034 = scmp.le.s32.totalorder 2, %s15
    // Predicated region
    $region57: #{_lambda_.2} parent=5 // pred_check
      %p2035 = pneg %p2034
    $region58: #{_lambda_.2} parent=5 // pred_check_branch
      %2037 = sbr.rel (%p2035) target = $region60
    $region59: #{_lambda_.2} parent=5 // pred_region
      %s2038 = ssub.s32 %s15, 2
      // Predicated region
      $region61: #{_lambda_.2} parent=59 // pred_check
        %p2039 = pneg %p196
      $region62: #{_lambda_.2} parent=59 // pred_check_branch
        %2041 = sbr.rel (%p2039) target = $region64
      $region63: #{_lambda_.2} parent=59 // pred_region
        %p2042 = scmp.lt.s32.totalorder %s21, 1
        %s2043 = scalar_select %p2042, %s21, 1
        %s2044 = smul.addr %s2043, 2
        %s2045 = smul.addr %s2044, 4
        %s2046 = scalar_lea.vmem %s7, %s2045
      $region64: #{_lambda_.2} parent=59 // pred_fallthru
        _
      // Predicated region
      $region65: #{_lambda_.2} parent=59 // pred_check
        %p2047 = pneg %p222
      $region66: #{_lambda_.2} parent=59 // pred_check_branch
        %2049 = sbr.rel (%p2047) target = $region68
      $region67: #{_lambda_.2} parent=59 // pred_region
        %p2050 = scmp.lt.s32.totalorder %s21, 1
        %s2051 = scalar_select %p2050, %s21, 1
        %s2052 = smul.addr %s2051, 8
        %s2053 = scalar_lea.vmem %s8, %s2052
      $region68: #{_lambda_.2} parent=59 // pred_fallthru
        _
    $region60: #{_lambda_.2} parent=5 // pred_fallthru
      _
  $region6: #{_lambda_.2} parent=0 // loop_footer
    %s19 = sadd.s32 1, %s15
  $region7: #{_lambda_.2} parent=0 // loop_footer_branch
    %14 = sbr.rel target = $region3
  $region8: #{_lambda_.2} parent=0 // loop_exit
    _

</llo_original>
